<compile_context>
chip_gen: v6e
topology: v6e:2x2x1
jax: 0.10.0
libtpu: 0.0.40
codegen_flags: <defaults>
</compile_context>

<pallas_src>
import functools
import math

import jax
import jax.numpy as jnp
from jax.experimental import pallas as pl
from jax.experimental.pallas import tpu as pltpu

HIDDEN = 32
NUM_HEADS = 4
NUM_KV_HEADS = 2
HEAD_DIM = HIDDEN // NUM_HEADS                 # 8
HALF = HEAD_DIM // 2                           # 4
NUM_KV_GROUPS = NUM_HEADS // NUM_KV_HEADS      # 2
ROPE_THETA = 10000.0
Q_DIM = NUM_HEADS * HEAD_DIM                   # 32
KV_DIM = NUM_KV_HEADS * HEAD_DIM               # 16
QKV_OUT = Q_DIM + 2 * KV_DIM                   # 64
PACK = 2 * HEAD_DIM + HIDDEN                   # 48: [cos | sin | attn_out]
NEG_INF = -1e30

_DOT_T = (((1,), (1,)), ((), ()))              # contract dim1 with dim1: x @ W.T


def _swap_halves(t):
    """Per-head half swap along lanes: [t1, t2] -> [t2, t1] for every
    HEAD_DIM-wide head in a slab.  Two static lane rolls + one select —
    slab-wide replacement for per-head rotate_half slicing."""
    w = t.shape[-1]
    lane = jax.lax.broadcasted_iota(jnp.int32, t.shape, 1)
    first_half = (lane % HEAD_DIM) < HALF
    # roll right by -HALF  (out[m] = in[m + HALF])
    left = jnp.concatenate([t[:, HALF:], t[:, :HALF]], axis=-1)
    # roll right by +HALF  (out[m] = in[m - HALF])
    right = jnp.concatenate([t[:, w - HALF:], t[:, :w - HALF]], axis=-1)
    return jnp.where(first_half, left, right)


# ---------------------------------------------------------------------------
# Fused kernel: one grid step processes the whole (B*S, HIDDEN) slab
# ---------------------------------------------------------------------------
def _fused_kernel(pos_ref, invf_ref, x_ref, wqkv_ref, wo_ref, out_ref, *, B, S):
    pos = pos_ref[...].astype(jnp.float32)        # (B*S, 1)
    invf = invf_ref[...].astype(jnp.float32)      # (1, HALF)
    x = x_ref[...].astype(jnp.float32)            # (B*S, HIDDEN)
    wqkv = wqkv_ref[...].astype(jnp.float32)      # (QKV_OUT, HIDDEN)
    wo = wo_ref[...].astype(jnp.float32)          # (HIDDEN, HIDDEN)

    # ---- LlamaRotaryEmbedding.forward: freqs = pos ⊗ inv_freq, emb = [f, f]
    freqs = pos * invf                            # (B*S, HALF)
    cosf = jnp.cos(freqs)
    sinf = jnp.sin(freqs)
    cos_full = jnp.concatenate([cosf, cosf], axis=-1)     # (B*S, HEAD_DIM)
    sin_full = jnp.concatenate([sinf, sinf], axis=-1)     # (B*S, HEAD_DIM)

    # slab-wide RoPE tables: cos tiled over heads, sin with the rotate_half
    # sign already folded in ([-s, s] per head).
    sin_pm = jnp.concatenate([-sinf, sinf], axis=-1)               # (B*S, HEAD_DIM)
    cos_q = jnp.concatenate([cos_full] * NUM_HEADS, axis=-1)       # (B*S, Q_DIM)
    sin_q = jnp.concatenate([sin_pm] * NUM_HEADS, axis=-1)         # (B*S, Q_DIM)
    cos_k = cos_q[:, :KV_DIM]
    sin_k = sin_q[:, :KV_DIM]

    # ---- qkv projection (weights kept (out, in); contract on dim 1 of both)
    qkv = jax.lax.dot_general(x, wqkv, _DOT_T,
                              preferred_element_type=jnp.float32)  # (B*S, QKV_OUT)
    q = qkv[:, :Q_DIM]
    k = qkv[:, Q_DIM:Q_DIM + KV_DIM]
    v = qkv[:, Q_DIM + KV_DIM:]

    # ---- RoPE in two slab-wide passes (1 for Q, 1 for K); scale folded into K
    scale = 1.0 / math.sqrt(HEAD_DIM)
    rq = q * cos_q + _swap_halves(q) * sin_q                       # (B*S, Q_DIM)
    rk = (k * cos_k + _swap_halves(k) * sin_k) * scale             # (B*S, KV_DIM)

    # causal mask for a G*S-row stacked-query score tile, built once
    rows = jax.lax.broadcasted_iota(jnp.int32, (NUM_KV_GROUPS * S, S), 0) % S
    cols = jax.lax.broadcasted_iota(jnp.int32, (NUM_KV_GROUPS * S, S), 1)
    causal_g = cols <= rows                                        # (G*S, S)

    outs = []
    for b in range(B):                       # tiny static unroll; row slices are
        r0, r1 = b * S, (b + 1) * S          # sublane-aligned (multiples of 8)
        rq_b, rk_b, v_b = rq[r0:r1], rk[r0:r1], v[r0:r1]
        o_b = jnp.zeros((S, HIDDEN), jnp.float32)
        for j in range(NUM_KV_HEADS):
            kj = rk_b[:, j * HEAD_DIM:(j + 1) * HEAD_DIM]          # (S, D)
            vj = v_b[:, j * HEAD_DIM:(j + 1) * HEAD_DIM]           # (S, D)
            h0 = j * NUM_KV_GROUPS
            # stack the group's query heads along rows -> fewer, fatter MXU pushes
            qg = jnp.concatenate(
                [rq_b[:, (h0 + g) * HEAD_DIM:(h0 + g + 1) * HEAD_DIM]
                 for g in range(NUM_KV_GROUPS)], axis=0)           # (G*S, D)
            s = jax.lax.dot_general(qg, kj, _DOT_T,
                                    preferred_element_type=jnp.float32)  # (G*S, S)
            s = jnp.where(causal_g, s, NEG_INF)
            s = s - jnp.max(s, axis=-1, keepdims=True)
            p = jnp.exp(s)
            p = p / jnp.sum(p, axis=-1, keepdims=True)   # exact softmax (no approx rcp)
            pv = jnp.dot(p, vj, preferred_element_type=jnp.float32)      # (G*S, D)
            # o_proj accumulated per head: no head-concat of attention outputs
            for g in range(NUM_KV_GROUPS):
                h = h0 + g
                o_b = o_b + jax.lax.dot_general(
                    pv[g * S:(g + 1) * S],
                    wo[:, h * HEAD_DIM:(h + 1) * HEAD_DIM], _DOT_T,
                    preferred_element_type=jnp.float32)            # (S, HIDDEN)
        outs.append(o_b)

    attn = jnp.concatenate(outs, axis=0)                           # (B*S, HIDDEN)
    # single packed store: [cos | sin | attn_out]
    packed = jnp.concatenate([cos_full, sin_full, attn], axis=-1)  # (B*S, PACK)
    out_ref[...] = packed.astype(out_ref.dtype)


# ---------------------------------------------------------------------------
# Wrapper
# ---------------------------------------------------------------------------
def llama_attention_forward(hidden_states, position_ids, inv_freq, w_qkv, w_o):
    """Returns (cos, sin, attn_out).  cos/sin match LlamaRotaryEmbedding.forward."""
    B, S, _ = hidden_states.shape
    x2d = hidden_states.reshape(B * S, HIDDEN)
    pos2d = position_ids.reshape(B * S, 1).astype(jnp.float32)
    invf2d = inv_freq.reshape(1, HALF).astype(jnp.float32)

    packed = pl.pallas_call(
        functools.partial(_fused_kernel, B=B, S=S),
        out_shape=jax.ShapeDtypeStruct((B * S, PACK), hidden_states.dtype),
        grid=(1,),                                              # single step: no per-step
        in_specs=[                                              # overhead on 1-TC chips
            pl.BlockSpec((B * S, 1), lambda i: (0, 0)),
            pl.BlockSpec((1, HALF), lambda i: (0, 0)),
            pl.BlockSpec((B * S, HIDDEN), lambda i: (0, 0)),
            pl.BlockSpec((QKV_OUT, HIDDEN), lambda i: (0, 0)),
            pl.BlockSpec((HIDDEN, HIDDEN), lambda i: (0, 0)),
        ],
        out_specs=pl.BlockSpec((B * S, PACK), lambda i: (0, 0)),
        compiler_params=pltpu.CompilerParams(
            dimension_semantics=("arbitrary",)),
    )(pos2d, invf2d, x2d, w_qkv, w_o)

    # split the packed slab in the wrapper (layout plumbing, not compute)
    cos = packed[:, :HEAD_DIM].reshape(B, S, HEAD_DIM)
    sin = packed[:, HEAD_DIM:2 * HEAD_DIM].reshape(B, S, HEAD_DIM)
    out = packed[:, 2 * HEAD_DIM:].reshape(B, S, HIDDEN)
    return cos, sin, out


# ---------------------------------------------------------------------------
# Pure-JAX references (mirror the PyTorch modules)
# ---------------------------------------------------------------------------
def reference_rotary(x, position_ids, inv_freq):
    B, S = position_ids.shape
    inv_freq_exp = jnp.broadcast_to(
        inv_freq[None, :, None].astype(jnp.float32), (B, inv_freq.shape[0], 1))
    pos_exp = position_ids[:, None, :].astype(jnp.float32)
    freqs = jnp.matmul(inv_freq_exp, pos_exp).transpose(0, 2, 1)   # (B, S, HALF)
    emb = jnp.concatenate([freqs, freqs], axis=-1)
    return jnp.cos(emb).astype(x.dtype), jnp.sin(emb).astype(x.dtype)


def reference_attention(hidden_states, cos, sin, w_qkv, w_o):
    B, S, _ = hidden_states.shape
    qkv = hidden_states @ w_qkv.T
    q, k, v = jnp.split(qkv, [Q_DIM, Q_DIM + KV_DIM], axis=-1)
    q = q.reshape(B, S, NUM_HEADS, HEAD_DIM).transpose(0, 2, 1, 3)
    k = k.reshape(B, S, NUM_KV_HEADS, HEAD_DIM).transpose(0, 2, 1, 3)
    v = v.reshape(B, S, NUM_KV_HEADS, HEAD_DIM).transpose(0, 2, 1, 3)

    def rot_half(t):
        d = t.shape[-1] // 2
        return jnp.concatenate([-t[..., d:], t[..., :d]], axis=-1)

    c = cos[:, None, :, :]
    s = sin[:, None, :, :]
    q = q * c + rot_half(q) * s
    k = k * c + rot_half(k) * s
    k = jnp.repeat(k, NUM_KV_GROUPS, axis=1)
    v = jnp.repeat(v, NUM_KV_GROUPS, axis=1)

    scale = 1.0 / math.sqrt(HEAD_DIM)
    scores = jnp.einsum("bhqd,bhkd->bhqk", q, k) * scale
    mask = jnp.tril(jnp.ones((S, S), dtype=bool))
    scores = jnp.where(mask, scores, NEG_INF)
    p = jax.nn.softmax(scores, axis=-1)
    attn = jnp.einsum("bhqk,bhkd->bhqd", p, v)
    attn = attn.transpose(0, 2, 1, 3).reshape(B, S, HIDDEN)
    return attn @ w_o.T


if __name__ == "__main__":
    key = jax.random.PRNGKey(0)
    kx, kqkv, ko = jax.random.split(key, 3)

    B, S = 2, 8
    x = jax.random.normal(kx, (B, S, HIDDEN), jnp.float32)
    position_ids = jnp.broadcast_to(jnp.arange(S, dtype=jnp.int32)[None, :], (B, S))

    # inv_freq buffer (llama3_rope_frequencies with scaling=None)
    inv_freq = 1.0 / (
        ROPE_THETA ** (jnp.arange(0, HEAD_DIM, 2, dtype=jnp.float32) / HEAD_DIM))

    # nn.Linear-shaped weights (out_features, in_features)
    w_qkv = jax.random.normal(kqkv, (QKV_OUT, HIDDEN), jnp.float32) * 0.05
    w_o = jax.random.normal(ko, (HIDDEN, HIDDEN), jnp.float32) * 0.05

    cos, sin, out = llama_attention_forward(x, position_ids, inv_freq, w_qkv, w_o)
    (cos, sin, out) = jax.block_until_ready((cos, sin, out))

    ref_cos, ref_sin = reference_rotary(x, position_ids, inv_freq)
    ref_out = reference_attention(x, ref_cos, ref_sin, w_qkv, w_o)

    assert cos.shape == (B, S, HEAD_DIM) and sin.shape == (B, S, HEAD_DIM)
    assert out.shape == (B, S, HIDDEN)
    assert jnp.allclose(cos, ref_cos, atol=1e-5, rtol=1e-5), (
        f"cos mismatch: {float(jnp.max(jnp.abs(cos - ref_cos)))}")
    assert jnp.allclose(sin, ref_sin, atol=1e-5, rtol=1e-5), (
        f"sin mismatch: {float(jnp.max(jnp.abs(sin - ref_sin)))}")
    # exact softmax now (approx reciprocal removed); residual diff is f32 matmul ordering
    assert jnp.allclose(out, ref_out, atol=1e-3, rtol=1e-3), (
        f"attn mismatch: {float(jnp.max(jnp.abs(out - ref_out)))}")
    print("KERNEL_OK")
</pallas_src>

<mosaic_0001>
module attributes {stable_mosaic.version = 11 : i64} {
  func.func @_fused_kernel(%arg0: i32, %arg1: memref<16x1xf32, #tpu.memory_space<vmem>>, %arg2: memref<1x4xf32, #tpu.memory_space<vmem>>, %arg3: memref<16x32xf32, #tpu.memory_space<vmem>>, %arg4: memref<64x32xf32, #tpu.memory_space<vmem>>, %arg5: memref<32x32xf32, #tpu.memory_space<vmem>>, %arg6: memref<16x48xf32, #tpu.memory_space<vmem>>) attributes {dimension_semantics = [#tpu.dimension_semantics<arbitrary>], iteration_bounds = array<i64: 1>, scalar_prefetch = 0 : i64, scratch_operands = 0 : i64, tpu.core_type = #tpu.core_type<tc>, window_params = [{pipeline_mode = #tpu.pipeline_mode<synchronous>, transform_indices = @transform_0, window_bounds = array<i64: 16, 1>}, {pipeline_mode = #tpu.pipeline_mode<synchronous>, transform_indices = @transform_1, window_bounds = array<i64: 1, 4>}, {pipeline_mode = #tpu.pipeline_mode<synchronous>, transform_indices = @transform_2, window_bounds = array<i64: 16, 32>}, {pipeline_mode = #tpu.pipeline_mode<synchronous>, transform_indices = @transform_3, window_bounds = array<i64: 64, 32>}, {pipeline_mode = #tpu.pipeline_mode<synchronous>, transform_indices = @transform_4, window_bounds = array<i64: 32, 32>}, {pipeline_mode = #tpu.pipeline_mode<synchronous>, transform_indices = @transform_5, window_bounds = array<i64: 16, 48>}]} {
    %c0 = arith.constant 0 : index
    %c0_0 = arith.constant 0 : index
    %0 = vector.load %arg1[%c0, %c0_0] : memref<16x1xf32, #tpu.memory_space<vmem>>, vector<16x1xf32>
    %c0_1 = arith.constant 0 : index
    %c0_2 = arith.constant 0 : index
    %1 = vector.load %arg2[%c0_1, %c0_2] : memref<1x4xf32, #tpu.memory_space<vmem>>, vector<1x4xf32>
    %c0_3 = arith.constant 0 : index
    %c0_4 = arith.constant 0 : index
    %2 = vector.load %arg3[%c0_3, %c0_4] : memref<16x32xf32, #tpu.memory_space<vmem>>, vector<16x32xf32>
    %c0_5 = arith.constant 0 : index
    %c0_6 = arith.constant 0 : index
    %3 = vector.load %arg4[%c0_5, %c0_6] : memref<64x32xf32, #tpu.memory_space<vmem>>, vector<64x32xf32>
    %c0_7 = arith.constant 0 : index
    %c0_8 = arith.constant 0 : index
    %4 = vector.load %arg5[%c0_7, %c0_8] : memref<32x32xf32, #tpu.memory_space<vmem>>, vector<32x32xf32>
    %5 = vector.broadcast %0 : vector<16x1xf32> to vector<16x4xf32>
    %6 = vector.broadcast %1 : vector<1x4xf32> to vector<16x4xf32>
    %7 = arith.mulf %5, %6 : vector<16x4xf32>
    %8 = math.cos %7 : vector<16x4xf32>
    %9 = math.sin %7 : vector<16x4xf32>
    %10 = tpu.concatenate %8, %8 in 1 : vector<16x4xf32>, vector<16x4xf32> -> vector<16x8xf32>
    %11 = tpu.concatenate %9, %9 in 1 : vector<16x4xf32>, vector<16x4xf32> -> vector<16x8xf32>
    %cst = arith.constant 0.000000e+00 : f32
    %12 = vector.broadcast %cst : f32 to vector<16x4xf32>
    %13 = arith.subf %12, %9 : vector<16x4xf32>
    %14 = tpu.concatenate %13, %9 in 1 : vector<16x4xf32>, vector<16x4xf32> -> vector<16x8xf32>
    %15 = tpu.concatenate %10, %10, %10, %10 in 1 : vector<16x8xf32>, vector<16x8xf32>, vector<16x8xf32>, vector<16x8xf32> -> vector<16x32xf32>
    %16 = tpu.concatenate %14, %14, %14, %14 in 1 : vector<16x8xf32>, vector<16x8xf32>, vector<16x8xf32>, vector<16x8xf32> -> vector<16x32xf32>
    %17 = vector.extract_strided_slice %15 {offsets = [0, 0], sizes = [16, 16], strides = [1, 1]} : vector<16x32xf32> to vector<16x16xf32>
    %18 = vector.extract_strided_slice %16 {offsets = [0, 0], sizes = [16, 16], strides = [1, 1]} : vector<16x32xf32> to vector<16x16xf32>
    %cst_9 = arith.constant dense<0.000000e+00> : vector<16x64xf32>
    %19 = tpu.matmul %2, %3, %cst_9 {dimension_numbers = #tpu.dot_dimension_numbers<[1], [1], [0], [0], [0, 0, 1, 0], [], []>} : vector<16x32xf32>, vector<64x32xf32>, vector<16x64xf32> -> vector<16x64xf32>
    %20 = vector.extract_strided_slice %19 {offsets = [0, 0], sizes = [16, 32], strides = [1, 1]} : vector<16x64xf32> to vector<16x32xf32>
    %21 = vector.extract_strided_slice %19 {offsets = [0, 32], sizes = [16, 16], strides = [1, 1]} : vector<16x64xf32> to vector<16x16xf32>
    %22 = vector.extract_strided_slice %19 {offsets = [0, 48], sizes = [16, 16], strides = [1, 1]} : vector<16x64xf32> to vector<16x16xf32>
    %23 = arith.mulf %20, %15 : vector<16x32xf32>
    %24 = tpu.iota {dimensions = array<i32: 1>} : vector<16x32xi32>
    %c8_i32 = arith.constant 8 : i32
    %c0_i32 = arith.constant 0 : i32
    %25 = arith.cmpi eq, %c8_i32, %c0_i32 : i32
    %c1_i32 = arith.constant 1 : i32
    %26 = arith.select %25, %c1_i32, %c8_i32 : i32
    %27 = vector.broadcast %26 : i32 to vector<16x32xi32>
    %28 = arith.remsi %24, %27 : vector<16x32xi32>
    %c0_i32_10 = arith.constant 0 : i32
    %29 = vector.broadcast %c0_i32_10 : i32 to vector<16x32xi32>
    %30 = arith.cmpi ne, %28, %29 : vector<16x32xi32>
    %c0_i32_11 = arith.constant 0 : i32
    %31 = vector.broadcast %c0_i32_11 : i32 to vector<16x32xi32>
    %32 = arith.cmpi slt, %28, %31 : vector<16x32xi32>
    %c0_i32_12 = arith.constant 0 : i32
    %33 = arith.cmpi slt, %26, %c0_i32_12 : i32
    %34 = vector.broadcast %33 : i1 to vector<16x32xi1>
    %35 = vector.broadcast %34 : vector<16x32xi1> to vector<16x32xi1>
    %36 = arith.xori %32, %35 : vector<16x32xi1>
    %37 = arith.andi %36, %30 : vector<16x32xi1>
    %38 = vector.broadcast %26 : i32 to vector<16x32xi32>
    %39 = arith.addi %28, %38 : vector<16x32xi32>
    %40 = arith.select %37, %39, %28 : vector<16x32xi1>, vector<16x32xi32>
    %c4_i32 = arith.constant 4 : i32
    %41 = vector.broadcast %c4_i32 : i32 to vector<16x32xi32>
    %42 = arith.cmpi slt, %40, %41 : vector<16x32xi32>
    %43 = vector.extract_strided_slice %20 {offsets = [0, 4], sizes = [16, 28], strides = [1, 1]} : vector<16x32xf32> to vector<16x28xf32>
    %44 = vector.extract_strided_slice %20 {offsets = [0, 0], sizes = [16, 4], strides = [1, 1]} : vector<16x32xf32> to vector<16x4xf32>
    %45 = tpu.concatenate %43, %44 in 1 : vector<16x28xf32>, vector<16x4xf32> -> vector<16x32xf32>
    %46 = vector.extract_strided_slice %20 {offsets = [0, 28], sizes = [16, 4], strides = [1, 1]} : vector<16x32xf32> to vector<16x4xf32>
    %47 = vector.extract_strided_slice %20 {offsets = [0, 0], sizes = [16, 28], strides = [1, 1]} : vector<16x32xf32> to vector<16x28xf32>
    %48 = tpu.concatenate %46, %47 in 1 : vector<16x4xf32>, vector<16x28xf32> -> vector<16x32xf32>
    %49 = arith.select %42, %45, %48 : vector<16x32xi1>, vector<16x32xf32>
    %50 = arith.mulf %49, %16 : vector<16x32xf32>
    %51 = arith.addf %23, %50 : vector<16x32xf32>
    %52 = arith.mulf %21, %17 : vector<16x16xf32>
    %53 = tpu.iota {dimensions = array<i32: 1>} : vector<16x16xi32>
    %c8_i32_13 = arith.constant 8 : i32
    %c0_i32_14 = arith.constant 0 : i32
    %54 = arith.cmpi eq, %c8_i32_13, %c0_i32_14 : i32
    %c1_i32_15 = arith.constant 1 : i32
    %55 = arith.select %54, %c1_i32_15, %c8_i32_13 : i32
    %56 = vector.broadcast %55 : i32 to vector<16x16xi32>
    %57 = arith.remsi %53, %56 : vector<16x16xi32>
    %c0_i32_16 = arith.constant 0 : i32
    %58 = vector.broadcast %c0_i32_16 : i32 to vector<16x16xi32>
    %59 = arith.cmpi ne, %57, %58 : vector<16x16xi32>
    %c0_i32_17 = arith.constant 0 : i32
    %60 = vector.broadcast %c0_i32_17 : i32 to vector<16x16xi32>
    %61 = arith.cmpi slt, %57, %60 : vector<16x16xi32>
    %c0_i32_18 = arith.constant 0 : i32
    %62 = arith.cmpi slt, %55, %c0_i32_18 : i32
    %63 = vector.broadcast %62 : i1 to vector<16x16xi1>
    %64 = vector.broadcast %63 : vector<16x16xi1> to vector<16x16xi1>
    %65 = arith.xori %61, %64 : vector<16x16xi1>
    %66 = arith.andi %65, %59 : vector<16x16xi1>
    %67 = vector.broadcast %55 : i32 to vector<16x16xi32>
    %68 = arith.addi %57, %67 : vector<16x16xi32>
    %69 = arith.select %66, %68, %57 : vector<16x16xi1>, vector<16x16xi32>
    %c4_i32_19 = arith.constant 4 : i32
    %70 = vector.broadcast %c4_i32_19 : i32 to vector<16x16xi32>
    %71 = arith.cmpi slt, %69, %70 : vector<16x16xi32>
    %72 = vector.extract_strided_slice %21 {offsets = [0, 4], sizes = [16, 12], strides = [1, 1]} : vector<16x16xf32> to vector<16x12xf32>
    %73 = vector.extract_strided_slice %21 {offsets = [0, 0], sizes = [16, 4], strides = [1, 1]} : vector<16x16xf32> to vector<16x4xf32>
    %74 = tpu.concatenate %72, %73 in 1 : vector<16x12xf32>, vector<16x4xf32> -> vector<16x16xf32>
    %75 = vector.extract_strided_slice %21 {offsets = [0, 12], sizes = [16, 4], strides = [1, 1]} : vector<16x16xf32> to vector<16x4xf32>
    %76 = vector.extract_strided_slice %21 {offsets = [0, 0], sizes = [16, 12], strides = [1, 1]} : vector<16x16xf32> to vector<16x12xf32>
    %77 = tpu.concatenate %75, %76 in 1 : vector<16x4xf32>, vector<16x12xf32> -> vector<16x16xf32>
    %78 = arith.select %71, %74, %77 : vector<16x16xi1>, vector<16x16xf32>
    %79 = arith.mulf %78, %18 : vector<16x16xf32>
    %80 = arith.addf %52, %79 : vector<16x16xf32>
    %cst_20 = arith.constant 0.353553385 : f32
    %81 = vector.broadcast %cst_20 : f32 to vector<16x16xf32>
    %82 = arith.mulf %80, %81 : vector<16x16xf32>
    %83 = tpu.iota {dimensions = array<i32: 0>} : vector<16x8xi32>
    %c8_i32_21 = arith.constant 8 : i32
    %c0_i32_22 = arith.constant 0 : i32
    %84 = arith.cmpi eq, %c8_i32_21, %c0_i32_22 : i32
    %c1_i32_23 = arith.constant 1 : i32
    %85 = arith.select %84, %c1_i32_23, %c8_i32_21 : i32
    %86 = vector.broadcast %85 : i32 to vector<16x8xi32>
    %87 = arith.remsi %83, %86 : vector<16x8xi32>
    %c0_i32_24 = arith.constant 0 : i32
    %88 = vector.broadcast %c0_i32_24 : i32 to vector<16x8xi32>
    %89 = arith.cmpi ne, %87, %88 : vector<16x8xi32>
    %c0_i32_25 = arith.constant 0 : i32
    %90 = vector.broadcast %c0_i32_25 : i32 to vector<16x8xi32>
    %91 = arith.cmpi slt, %87, %90 : vector<16x8xi32>
    %c0_i32_26 = arith.constant 0 : i32
    %92 = arith.cmpi slt, %85, %c0_i32_26 : i32
    %93 = vector.broadcast %92 : i1 to vector<16x8xi1>
    %94 = vector.broadcast %93 : vector<16x8xi1> to vector<16x8xi1>
    %95 = arith.xori %91, %94 : vector<16x8xi1>
    %96 = arith.andi %95, %89 : vector<16x8xi1>
    %97 = vector.broadcast %85 : i32 to vector<16x8xi32>
    %98 = arith.addi %87, %97 : vector<16x8xi32>
    %99 = arith.select %96, %98, %87 : vector<16x8xi1>, vector<16x8xi32>
    %100 = tpu.iota {dimensions = array<i32: 1>} : vector<16x8xi32>
    %101 = arith.cmpi sle, %100, %99 : vector<16x8xi32>
    %102 = vector.extract_strided_slice %51 {offsets = [0, 0], sizes = [8, 32], strides = [1, 1]} : vector<16x32xf32> to vector<8x32xf32>
    %103 = vector.extract_strided_slice %82 {offsets = [0, 0], sizes = [8, 16], strides = [1, 1]} : vector<16x16xf32> to vector<8x16xf32>
    %104 = vector.extract_strided_slice %22 {offsets = [0, 0], sizes = [8, 16], strides = [1, 1]} : vector<16x16xf32> to vector<8x16xf32>
    %cst_27 = arith.constant 0.000000e+00 : f32
    %105 = vector.broadcast %cst_27 : f32 to vector<8x32xf32>
    %106 = vector.extract_strided_slice %103 {offsets = [0, 0], sizes = [8, 8], strides = [1, 1]} : vector<8x16xf32> to vector<8x8xf32>
    %107 = vector.extract_strided_slice %104 {offsets = [0, 0], sizes = [8, 8], strides = [1, 1]} : vector<8x16xf32> to vector<8x8xf32>
    %108 = vector.extract_strided_slice %102 {offsets = [0, 0], sizes = [8, 8], strides = [1, 1]} : vector<8x32xf32> to vector<8x8xf32>
    %109 = vector.extract_strided_slice %102 {offsets = [0, 8], sizes = [8, 8], strides = [1, 1]} : vector<8x32xf32> to vector<8x8xf32>
    %110 = tpu.concatenate %108, %109 in 0 : vector<8x8xf32>, vector<8x8xf32> -> vector<16x8xf32>
    %cst_28 = arith.constant dense<0.000000e+00> : vector<16x8xf32>
    %111 = tpu.matmul %110, %106, %cst_28 {dimension_numbers = #tpu.dot_dimension_numbers<[1], [1], [0], [0], [0, 0, 1, 0], [], []>} : vector<16x8xf32>, vector<8x8xf32>, vector<16x8xf32> -> vector<16x8xf32>
    %cst_29 = arith.constant -1.000000e+30 : f32
    %112 = vector.broadcast %cst_29 : f32 to vector<16x8xf32>
    %113 = arith.select %101, %111, %112 : vector<16x8xi1>, vector<16x8xf32>
    %cst_30 = arith.constant dense<0xFF800000> : vector<16xf32>
    %114 = vector.multi_reduction <maximumf>, %113, %cst_30 [1] : vector<16x8xf32> to vector<16xf32>
    %115 = vector.shape_cast %114 : vector<16xf32> to vector<16x1xf32>
    %116 = vector.broadcast %115 : vector<16x1xf32> to vector<16x8xf32>
    %117 = arith.subf %113, %116 : vector<16x8xf32>
    %118 = math.exp %117 : vector<16x8xf32>
    %cst_31 = arith.constant dense<0.000000e+00> : vector<16xf32>
    %119 = vector.multi_reduction <add>, %118, %cst_31 [1] : vector<16x8xf32> to vector<16xf32>
    %120 = vector.shape_cast %119 : vector<16xf32> to vector<16x1xf32>
    %121 = vector.broadcast %120 : vector<16x1xf32> to vector<16x8xf32>
    %122 = arith.divf %118, %121 : vector<16x8xf32>
    %cst_32 = arith.constant dense<0.000000e+00> : vector<16x8xf32>
    %123 = tpu.matmul %122, %107, %cst_32 {dimension_numbers = #tpu.dot_dimension_numbers<[1], [0], [0], [1], [0, 0, 1, 1], [], []>} : vector<16x8xf32>, vector<8x8xf32>, vector<16x8xf32> -> vector<16x8xf32>
    %124 = vector.extract_strided_slice %123 {offsets = [0, 0], sizes = [8, 8], strides = [1, 1]} : vector<16x8xf32> to vector<8x8xf32>
    %125 = vector.extract_strided_slice %4 {offsets = [0, 0], sizes = [32, 8], strides = [1, 1]} : vector<32x32xf32> to vector<32x8xf32>
    %cst_33 = arith.constant dense<0.000000e+00> : vector<8x32xf32>
    %126 = tpu.matmul %124, %125, %cst_33 {dimension_numbers = #tpu.dot_dimension_numbers<[1], [1], [0], [0], [0, 0, 1, 0], [], []>} : vector<8x8xf32>, vector<32x8xf32>, vector<8x32xf32> -> vector<8x32xf32>
    %127 = arith.addf %105, %126 : vector<8x32xf32>
    %128 = vector.extract_strided_slice %123 {offsets = [8, 0], sizes = [8, 8], strides = [1, 1]} : vector<16x8xf32> to vector<8x8xf32>
    %129 = vector.extract_strided_slice %4 {offsets = [0, 8], sizes = [32, 8], strides = [1, 1]} : vector<32x32xf32> to vector<32x8xf32>
    %cst_34 = arith.constant dense<0.000000e+00> : vector<8x32xf32>
    %130 = tpu.matmul %128, %129, %cst_34 {dimension_numbers = #tpu.dot_dimension_numbers<[1], [1], [0], [0], [0, 0, 1, 0], [], []>} : vector<8x8xf32>, vector<32x8xf32>, vector<8x32xf32> -> vector<8x32xf32>
    %131 = arith.addf %127, %130 : vector<8x32xf32>
    %132 = vector.extract_strided_slice %103 {offsets = [0, 8], sizes = [8, 8], strides = [1, 1]} : vector<8x16xf32> to vector<8x8xf32>
    %133 = vector.extract_strided_slice %104 {offsets = [0, 8], sizes = [8, 8], strides = [1, 1]} : vector<8x16xf32> to vector<8x8xf32>
    %134 = vector.extract_strided_slice %102 {offsets = [0, 16], sizes = [8, 8], strides = [1, 1]} : vector<8x32xf32> to vector<8x8xf32>
    %135 = vector.extract_strided_slice %102 {offsets = [0, 24], sizes = [8, 8], strides = [1, 1]} : vector<8x32xf32> to vector<8x8xf32>
    %136 = tpu.concatenate %134, %135 in 0 : vector<8x8xf32>, vector<8x8xf32> -> vector<16x8xf32>
    %cst_35 = arith.constant dense<0.000000e+00> : vector<16x8xf32>
    %137 = tpu.matmul %136, %132, %cst_35 {dimension_numbers = #tpu.dot_dimension_numbers<[1], [1], [0], [0], [0, 0, 1, 0], [], []>} : vector<16x8xf32>, vector<8x8xf32>, vector<16x8xf32> -> vector<16x8xf32>
    %cst_36 = arith.constant -1.000000e+30 : f32
    %138 = vector.broadcast %cst_36 : f32 to vector<16x8xf32>
    %139 = arith.select %101, %137, %138 : vector<16x8xi1>, vector<16x8xf32>
    %cst_37 = arith.constant dense<0xFF800000> : vector<16xf32>
    %140 = vector.multi_reduction <maximumf>, %139, %cst_37 [1] : vector<16x8xf32> to vector<16xf32>
    %141 = vector.shape_cast %140 : vector<16xf32> to vector<16x1xf32>
    %142 = vector.broadcast %141 : vector<16x1xf32> to vector<16x8xf32>
    %143 = arith.subf %139, %142 : vector<16x8xf32>
    %144 = math.exp %143 : vector<16x8xf32>
    %cst_38 = arith.constant dense<0.000000e+00> : vector<16xf32>
    %145 = vector.multi_reduction <add>, %144, %cst_38 [1] : vector<16x8xf32> to vector<16xf32>
    %146 = vector.shape_cast %145 : vector<16xf32> to vector<16x1xf32>
    %147 = vector.broadcast %146 : vector<16x1xf32> to vector<16x8xf32>
    %148 = arith.divf %144, %147 : vector<16x8xf32>
    %cst_39 = arith.constant dense<0.000000e+00> : vector<16x8xf32>
    %149 = tpu.matmul %148, %133, %cst_39 {dimension_numbers = #tpu.dot_dimension_numbers<[1], [0], [0], [1], [0, 0, 1, 1], [], []>} : vector<16x8xf32>, vector<8x8xf32>, vector<16x8xf32> -> vector<16x8xf32>
    %150 = vector.extract_strided_slice %149 {offsets = [0, 0], sizes = [8, 8], strides = [1, 1]} : vector<16x8xf32> to vector<8x8xf32>
    %151 = vector.extract_strided_slice %4 {offsets = [0, 16], sizes = [32, 8], strides = [1, 1]} : vector<32x32xf32> to vector<32x8xf32>
    %cst_40 = arith.constant dense<0.000000e+00> : vector<8x32xf32>
    %152 = tpu.matmul %150, %151, %cst_40 {dimension_numbers = #tpu.dot_dimension_numbers<[1], [1], [0], [0], [0, 0, 1, 0], [], []>} : vector<8x8xf32>, vector<32x8xf32>, vector<8x32xf32> -> vector<8x32xf32>
    %153 = arith.addf %131, %152 : vector<8x32xf32>
    %154 = vector.extract_strided_slice %149 {offsets = [8, 0], sizes = [8, 8], strides = [1, 1]} : vector<16x8xf32> to vector<8x8xf32>
    %155 = vector.extract_strided_slice %4 {offsets = [0, 24], sizes = [32, 8], strides = [1, 1]} : vector<32x32xf32> to vector<32x8xf32>
    %cst_41 = arith.constant dense<0.000000e+00> : vector<8x32xf32>
    %156 = tpu.matmul %154, %155, %cst_41 {dimension_numbers = #tpu.dot_dimension_numbers<[1], [1], [0], [0], [0, 0, 1, 0], [], []>} : vector<8x8xf32>, vector<32x8xf32>, vector<8x32xf32> -> vector<8x32xf32>
    %157 = arith.addf %153, %156 : vector<8x32xf32>
    %158 = vector.extract_strided_slice %51 {offsets = [8, 0], sizes = [8, 32], strides = [1, 1]} : vector<16x32xf32> to vector<8x32xf32>
    %159 = vector.extract_strided_slice %82 {offsets = [8, 0], sizes = [8, 16], strides = [1, 1]} : vector<16x16xf32> to vector<8x16xf32>
    %160 = vector.extract_strided_slice %22 {offsets = [8, 0], sizes = [8, 16], strides = [1, 1]} : vector<16x16xf32> to vector<8x16xf32>
    %cst_42 = arith.constant 0.000000e+00 : f32
    %161 = vector.broadcast %cst_42 : f32 to vector<8x32xf32>
    %162 = vector.extract_strided_slice %159 {offsets = [0, 0], sizes = [8, 8], strides = [1, 1]} : vector<8x16xf32> to vector<8x8xf32>
    %163 = vector.extract_strided_slice %160 {offsets = [0, 0], sizes = [8, 8], strides = [1, 1]} : vector<8x16xf32> to vector<8x8xf32>
    %164 = vector.extract_strided_slice %158 {offsets = [0, 0], sizes = [8, 8], strides = [1, 1]} : vector<8x32xf32> to vector<8x8xf32>
    %165 = vector.extract_strided_slice %158 {offsets = [0, 8], sizes = [8, 8], strides = [1, 1]} : vector<8x32xf32> to vector<8x8xf32>
    %166 = tpu.concatenate %164, %165 in 0 : vector<8x8xf32>, vector<8x8xf32> -> vector<16x8xf32>
    %cst_43 = arith.constant dense<0.000000e+00> : vector<16x8xf32>
    %167 = tpu.matmul %166, %162, %cst_43 {dimension_numbers = #tpu.dot_dimension_numbers<[1], [1], [0], [0], [0, 0, 1, 0], [], []>} : vector<16x8xf32>, vector<8x8xf32>, vector<16x8xf32> -> vector<16x8xf32>
    %cst_44 = arith.constant -1.000000e+30 : f32
    %168 = vector.broadcast %cst_44 : f32 to vector<16x8xf32>
    %169 = arith.select %101, %167, %168 : vector<16x8xi1>, vector<16x8xf32>
    %cst_45 = arith.constant dense<0xFF800000> : vector<16xf32>
    %170 = vector.multi_reduction <maximumf>, %169, %cst_45 [1] : vector<16x8xf32> to vector<16xf32>
    %171 = vector.shape_cast %170 : vector<16xf32> to vector<16x1xf32>
    %172 = vector.broadcast %171 : vector<16x1xf32> to vector<16x8xf32>
    %173 = arith.subf %169, %172 : vector<16x8xf32>
    %174 = math.exp %173 : vector<16x8xf32>
    %cst_46 = arith.constant dense<0.000000e+00> : vector<16xf32>
    %175 = vector.multi_reduction <add>, %174, %cst_46 [1] : vector<16x8xf32> to vector<16xf32>
    %176 = vector.shape_cast %175 : vector<16xf32> to vector<16x1xf32>
    %177 = vector.broadcast %176 : vector<16x1xf32> to vector<16x8xf32>
    %178 = arith.divf %174, %177 : vector<16x8xf32>
    %cst_47 = arith.constant dense<0.000000e+00> : vector<16x8xf32>
    %179 = tpu.matmul %178, %163, %cst_47 {dimension_numbers = #tpu.dot_dimension_numbers<[1], [0], [0], [1], [0, 0, 1, 1], [], []>} : vector<16x8xf32>, vector<8x8xf32>, vector<16x8xf32> -> vector<16x8xf32>
    %180 = vector.extract_strided_slice %179 {offsets = [0, 0], sizes = [8, 8], strides = [1, 1]} : vector<16x8xf32> to vector<8x8xf32>
    %181 = vector.extract_strided_slice %4 {offsets = [0, 0], sizes = [32, 8], strides = [1, 1]} : vector<32x32xf32> to vector<32x8xf32>
    %cst_48 = arith.constant dense<0.000000e+00> : vector<8x32xf32>
    %182 = tpu.matmul %180, %181, %cst_48 {dimension_numbers = #tpu.dot_dimension_numbers<[1], [1], [0], [0], [0, 0, 1, 0], [], []>} : vector<8x8xf32>, vector<32x8xf32>, vector<8x32xf32> -> vector<8x32xf32>
    %183 = arith.addf %161, %182 : vector<8x32xf32>
    %184 = vector.extract_strided_slice %179 {offsets = [8, 0], sizes = [8, 8], strides = [1, 1]} : vector<16x8xf32> to vector<8x8xf32>
    %185 = vector.extract_strided_slice %4 {offsets = [0, 8], sizes = [32, 8], strides = [1, 1]} : vector<32x32xf32> to vector<32x8xf32>
    %cst_49 = arith.constant dense<0.000000e+00> : vector<8x32xf32>
    %186 = tpu.matmul %184, %185, %cst_49 {dimension_numbers = #tpu.dot_dimension_numbers<[1], [1], [0], [0], [0, 0, 1, 0], [], []>} : vector<8x8xf32>, vector<32x8xf32>, vector<8x32xf32> -> vector<8x32xf32>
    %187 = arith.addf %183, %186 : vector<8x32xf32>
    %188 = vector.extract_strided_slice %159 {offsets = [0, 8], sizes = [8, 8], strides = [1, 1]} : vector<8x16xf32> to vector<8x8xf32>
    %189 = vector.extract_strided_slice %160 {offsets = [0, 8], sizes = [8, 8], strides = [1, 1]} : vector<8x16xf32> to vector<8x8xf32>
    %190 = vector.extract_strided_slice %158 {offsets = [0, 16], sizes = [8, 8], strides = [1, 1]} : vector<8x32xf32> to vector<8x8xf32>
    %191 = vector.extract_strided_slice %158 {offsets = [0, 24], sizes = [8, 8], strides = [1, 1]} : vector<8x32xf32> to vector<8x8xf32>
    %192 = tpu.concatenate %190, %191 in 0 : vector<8x8xf32>, vector<8x8xf32> -> vector<16x8xf32>
    %cst_50 = arith.constant dense<0.000000e+00> : vector<16x8xf32>
    %193 = tpu.matmul %192, %188, %cst_50 {dimension_numbers = #tpu.dot_dimension_numbers<[1], [1], [0], [0], [0, 0, 1, 0], [], []>} : vector<16x8xf32>, vector<8x8xf32>, vector<16x8xf32> -> vector<16x8xf32>
    %cst_51 = arith.constant -1.000000e+30 : f32
    %194 = vector.broadcast %cst_51 : f32 to vector<16x8xf32>
    %195 = arith.select %101, %193, %194 : vector<16x8xi1>, vector<16x8xf32>
    %cst_52 = arith.constant dense<0xFF800000> : vector<16xf32>
    %196 = vector.multi_reduction <maximumf>, %195, %cst_52 [1] : vector<16x8xf32> to vector<16xf32>
    %197 = vector.shape_cast %196 : vector<16xf32> to vector<16x1xf32>
    %198 = vector.broadcast %197 : vector<16x1xf32> to vector<16x8xf32>
    %199 = arith.subf %195, %198 : vector<16x8xf32>
    %200 = math.exp %199 : vector<16x8xf32>
    %cst_53 = arith.constant dense<0.000000e+00> : vector<16xf32>
    %201 = vector.multi_reduction <add>, %200, %cst_53 [1] : vector<16x8xf32> to vector<16xf32>
    %202 = vector.shape_cast %201 : vector<16xf32> to vector<16x1xf32>
    %203 = vector.broadcast %202 : vector<16x1xf32> to vector<16x8xf32>
    %204 = arith.divf %200, %203 : vector<16x8xf32>
    %cst_54 = arith.constant dense<0.000000e+00> : vector<16x8xf32>
    %205 = tpu.matmul %204, %189, %cst_54 {dimension_numbers = #tpu.dot_dimension_numbers<[1], [0], [0], [1], [0, 0, 1, 1], [], []>} : vector<16x8xf32>, vector<8x8xf32>, vector<16x8xf32> -> vector<16x8xf32>
    %206 = vector.extract_strided_slice %205 {offsets = [0, 0], sizes = [8, 8], strides = [1, 1]} : vector<16x8xf32> to vector<8x8xf32>
    %207 = vector.extract_strided_slice %4 {offsets = [0, 16], sizes = [32, 8], strides = [1, 1]} : vector<32x32xf32> to vector<32x8xf32>
    %cst_55 = arith.constant dense<0.000000e+00> : vector<8x32xf32>
    %208 = tpu.matmul %206, %207, %cst_55 {dimension_numbers = #tpu.dot_dimension_numbers<[1], [1], [0], [0], [0, 0, 1, 0], [], []>} : vector<8x8xf32>, vector<32x8xf32>, vector<8x32xf32> -> vector<8x32xf32>
    %209 = arith.addf %187, %208 : vector<8x32xf32>
    %210 = vector.extract_strided_slice %205 {offsets = [8, 0], sizes = [8, 8], strides = [1, 1]} : vector<16x8xf32> to vector<8x8xf32>
    %211 = vector.extract_strided_slice %4 {offsets = [0, 24], sizes = [32, 8], strides = [1, 1]} : vector<32x32xf32> to vector<32x8xf32>
    %cst_56 = arith.constant dense<0.000000e+00> : vector<8x32xf32>
    %212 = tpu.matmul %210, %211, %cst_56 {dimension_numbers = #tpu.dot_dimension_numbers<[1], [1], [0], [0], [0, 0, 1, 0], [], []>} : vector<8x8xf32>, vector<32x8xf32>, vector<8x32xf32> -> vector<8x32xf32>
    %213 = arith.addf %209, %212 : vector<8x32xf32>
    %214 = tpu.concatenate %157, %213 in 0 : vector<8x32xf32>, vector<8x32xf32> -> vector<16x32xf32>
    %215 = tpu.concatenate %10, %11, %214 in 1 : vector<16x8xf32>, vector<16x8xf32>, vector<16x32xf32> -> vector<16x48xf32>
    %c0_57 = arith.constant 0 : index
    %c0_58 = arith.constant 0 : index
    %216 = vector.load %arg6[%c0_57, %c0_58] : memref<16x48xf32, #tpu.memory_space<vmem>>, vector<16x48xf32>
    tpu.vector_store %arg6[%c0_57, %c0_58], %215 {strides = array<i32>} : memref<16x48xf32, #tpu.memory_space<vmem>>, vector<16x48xf32>,
    return
  }
  func.func @transform_0(%arg0: i32) -> (i32, i32) {
    %c0_i32 = arith.constant 0 : i32
    %c0_i32_0 = arith.constant 0 : i32
    %c0_i32_1 = arith.constant 0 : i32
    return %c0_i32, %c0_i32_0 : i32, i32
  }
  func.func @transform_1(%arg0: i32) -> (i32, i32) {
    %c0_i32 = arith.constant 0 : i32
    %c0_i32_0 = arith.constant 0 : i32
    %c0_i32_1 = arith.constant 0 : i32
    return %c0_i32, %c0_i32_0 : i32, i32
  }
  func.func @transform_2(%arg0: i32) -> (i32, i32) {
    %c0_i32 = arith.constant 0 : i32
    %c0_i32_0 = arith.constant 0 : i32
    %c0_i32_1 = arith.constant 0 : i32
    return %c0_i32, %c0_i32_0 : i32, i32
  }
  func.func @transform_3(%arg0: i32) -> (i32, i32) {
    %c0_i32 = arith.constant 0 : i32
    %c0_i32_0 = arith.constant 0 : i32
    %c0_i32_1 = arith.constant 0 : i32
    return %c0_i32, %c0_i32_0 : i32, i32
  }
  func.func @transform_4(%arg0: i32) -> (i32, i32) {
    %c0_i32 = arith.constant 0 : i32
    %c0_i32_0 = arith.constant 0 : i32
    %c0_i32_1 = arith.constant 0 : i32
    return %c0_i32, %c0_i32_0 : i32, i32
  }
  func.func @transform_5(%arg0: i32) -> (i32, i32) {
    %c0_i32 = arith.constant 0 : i32
    %c0_i32_0 = arith.constant 0 : i32
    %c0_i32_1 = arith.constant 0 : i32
    return %c0_i32, %c0_i32_0 : i32, i32
  }
}

</mosaic_0001>

<llo_original>
// kernel: tpu_custom_call.1
$region0: #{tpu_custom_call.1}
  #allocation0 [shape = 'u32[]', space=smem, size = 0x4, offset = 0x4, fixed_abs, tag = 'smem constant byte address 0x4 - core index']
  #allocation1 [shape = 'u32[144,128]{1,0:T(1,128)}', space=vmem, size = 0x12000, scoped, tag = 'internal scratch']
  %s0 = inlined_call_operand.vmem [shape: f32[16,1], index: 0, kind: input, shape index: {}]
  %s1 = inlined_call_operand.vmem [shape: f32[1,4], index: 1, kind: input, shape index: {}]
  %s2 = inlined_call_operand.vmem [shape: f32[16,32], index: 2, kind: input, shape index: {}]
  %s3 = inlined_call_operand.vmem [shape: f32[64,32], index: 3, kind: input, shape index: {}]
  %s4 = inlined_call_operand.vmem [shape: f32[32,32], index: 4, kind: input, shape index: {}]
  %s5 = inlined_call_operand.hbm [shape: f32[16,48], index: 5, kind: output, shape index: {}]
  %s6 = sld [smem:[#allocation0]]
  $region30: #{tpu_custom_call.1} parent=0
    _
  %s8 = ssub.s32 1, %s6
  %s9 = scalar_select 0, %s8, %s6
  $region1: #{tpu_custom_call.1} parent=0
    #allocation2 [shape = 'u8[8192]{0}', space=vmem, size = 0x2000, scoped, tag = 'output window, operand 0, single buffered']
    #allocation3 [shape = 's32[1]{0}', space=sflag, size = 0x4, scoped, tag = 'scoped memory for tpu_custom_call.1']
    %10 = vsyncpa [#allocation3], 0
    // Predicated region
    $region2: #{tpu_custom_call.1} parent=1 // pred_check
      _
    $region3: #{tpu_custom_call.1} parent=1 // pred_check_branch
      %12 = sbr.rel (0) target = $region5
    $region4: #{tpu_custom_call.1} parent=1 // pred_region
      _
    $region5: #{tpu_custom_call.1} parent=1 // pred_fallthru
      _
    // Predicated region
    $region6: #{tpu_custom_call.1} parent=1 // pred_check
      _
    $region7: #{tpu_custom_call.1} parent=1 // pred_check_branch
      %14 = sbr.rel (0) target = $region9
    $region8: #{tpu_custom_call.1} parent=1 // pred_region
      _
    $region9: #{tpu_custom_call.1} parent=1 // pred_fallthru
      _
    // Predicated region
    $region10: #{tpu_custom_call.1} parent=1 // pred_check
      _
    $region11: #{tpu_custom_call.1} parent=1 // pred_check_branch
      %16 = sbr.rel (0) target = $region13
    $region12: #{tpu_custom_call.1} parent=1 // pred_region
      _
    $region13: #{tpu_custom_call.1} parent=1 // pred_fallthru
      _
    // Predicated region
    $region14: #{tpu_custom_call.1} parent=1 // pred_check
      _
    $region15: #{tpu_custom_call.1} parent=1 // pred_check_branch
      %18 = sbr.rel (0) target = $region17
    $region16: #{tpu_custom_call.1} parent=1 // pred_region
      _
    $region17: #{tpu_custom_call.1} parent=1 // pred_fallthru
      _
    // Predicated region
    $region18: #{tpu_custom_call.1} parent=1 // pred_check
      _
    $region19: #{tpu_custom_call.1} parent=1 // pred_check_branch
      %20 = sbr.rel (0) target = $region21
    $region20: #{tpu_custom_call.1} parent=1 // pred_region
      _
    $region21: #{tpu_custom_call.1} parent=1 // pred_fallthru
      _
    %v21 = vld [vmem:[%s0] sm:$0xff]
    %v22 = vld [vmem:[%s0 + $0x8] sm:$0xff]
    %v23 = vld [vmem:[%s1] sm:$0x1]
    %v24 = vld [vmem:[%s2] sm:$0xff]
    %v25 = vld [vmem:[%s2 + $0x8] sm:$0xff]
    %v26 = vld [vmem:[%s3] sm:$0xff]
    %v27 = vld [vmem:[%s3 + $0x8] sm:$0xff]
    %v28 = vld [vmem:[%s3 + $0x10] sm:$0xff]
    %v29 = vld [vmem:[%s3 + $0x18] sm:$0xff]
    %v30 = vld [vmem:[%s3 + $0x20] sm:$0xff]
    %v31 = vld [vmem:[%s3 + $0x28] sm:$0xff]
    %v32 = vld [vmem:[%s3 + $0x30] sm:$0xff]
    %v33 = vld [vmem:[%s3 + $0x38] sm:$0xff]
    %v34 = vld [vmem:[%s4] sm:$0xff]
    %v35 = vld [vmem:[%s4 + $0x8] sm:$0xff]
    %v36 = vld [vmem:[%s4 + $0x10] sm:$0xff]
    %v37 = vld [vmem:[%s4 + $0x18] sm:$0xff]
    %39 = vset.pattern.permute.xlu0 0
    %40 = vperm.xlu0 %39, %v21
    %v41 = vpop.permute.xlu0 %40
    %44 = vset.pattern.permute.xlu0 0
    %45 = vperm.xlu0 %44, %v22
    %v46 = vpop.permute.xlu0 %45
    %v49 = vlaneseq
    %v50 = vshrl.u32 %v49, 7
    %v51 = vsub.s32 0, %v50
    %v52 = vrot.slane %v23, %v51
    %v54 = vmul.f32 %v41, %v52
    %v55 = vmul.f32 %v46, %v52
    %v56 = vand.u32 2147483647, %v54
    %vm57 = vcmp.le.f32.partialorder %v56, 0.7853982
    %vm58 = vcmp.lt.s32.totalorder %v54, 0
    %v59 = vand.u32 %v54, 2139095040
    %v60 = vshrl.u32 %v59, 23
    %v61 = vsub.s32 %v60, 127
    %v62 = vand.u32 2147483647, %v54
    %v63 = vand.u32 %v62, 8388607
    %v64 = vor.u32 %v63, 8388608
    %v65 = vsub.s32 0, %v64
    %v66 = vadd.s32 %v61, 1
    %vm67 = vcmp.gt.s32.totalorder %v66, 0
    %v68 = vsel %vm67, %v66, 0
    %v69 = vshrl.u32 %v68, 5
    %v70 = vand.u32 %v68, 31
    %v71 = vsub.s32 32, %v70
    %v72 = vshrl.u32 683565275, %v71
    %v73 = vshll.u32 683565275, %v70
    %v74 = vshrl.u32 2475754826, %v71
    %v75 = vor.u32 %v73, %v74
    %v76 = vshll.u32 2475754826, %v70
    %v77 = vshrl.u32 2131351028, %v71
    %v78 = vor.u32 %v76, %v77
    %v79 = vshll.u32 2131351028, %v70
    %v80 = vshrl.u32 2102212464, %v71
    %v81 = vor.u32 %v79, %v80
    %v82 = vshll.u32 2102212464, %v70
    %v83 = vshrl.u32 920167782, %v71
    %v84 = vor.u32 %v82, %v83
    %v85 = vshll.u32 920167782, %v70
    %v86 = vshrl.u32 1326507024, %v71
    %v87 = vor.u32 %v85, %v86
    %vm88 = vcmp.lt.s32.totalorder %v69, 1
    %vm89 = vcmp.lt.s32.totalorder %v69, 2
    %vm90 = vcmp.lt.s32.totalorder %v69, 3
    %vm91 = vcmp.lt.s32.totalorder %v69, 4
    %v92 = vsel %vm88, %v72, %v75
    %v93 = vsel %vm91, %v81, 2102212464
    %v94 = vsel %vm90, %v78, %v93
    %v95 = vsel %vm89, %v92, %v94
    %v96 = vsel %vm88, %v75, %v78
    %v97 = vsel %vm91, %v84, 920167782
    %v98 = vsel %vm90, %v81, %v97
    %v99 = vsel %vm89, %v96, %v98
    %v100 = vsel %vm88, %v78, %v81
    %v101 = vsel %vm91, %v87, 1326507024
    %v102 = vsel %vm90, %v84, %v101
    %v103 = vsel %vm89, %v100, %v102
    %v104 = vshll.u32 %v64, 8
    %v105 = vmul.u32.u64.compose %v104, %v103
    %v106 = vextract.low.u32 %v105
    %v107 = vextract.high.u32 %v105
    %v108 = vmul.u32.u64.compose %v104, %v99
    %v109 = vextract.low.u32 %v108
    %v110 = vextract.high.u32 %v108
    %v111 = vmul.u32 %v104, %v95
    %v112 = vadd.s32 %v107, %v109
    %vm113 = vc.u32 %v107, %v109
    %v114 = vadd.s32 %v110, 1
    %v115 = vsel %vm113, %v114, %v110
    %v116 = vadd.s32 %v111, %v115
    %v117 = vadd.s32 %v116, 536870912
    %v118 = vshrl.u32 %v117, 30
    %v119 = vshll.u32 %v118, 30
    %v120 = vsub.s32 %v116, %v119
    %vm121 = vcmp.lt.s32.totalorder %v120, 0
    %v122 = vsub.s32 0, %v120
    %v123 = vsel %vm121, %v122, %v120
    %v124 = vclz %v123
    %v125 = vsub.s32 %v124, 2
    %vm126 = vcmp.gt.s32.totalorder 0, %v125
    %v127 = vsel %vm126, 0, %v125
    %v128 = vsub.s32 32, %v127
    %v129 = vshll.u32 %v120, %v127
    %v130 = vshrl.u32 %v112, %v128
    %v131 = vor.u32 %v129, %v130
    %v132 = vsub.s32 4294967266, %v127
    %v133 = vadd.s32 %v132, 127
    %v134 = vshll.u32 %v133, 23
    %v135 = vor.u32 4788187, %v134
    %v136 = vand.u32 2147483647, %v135
    %v138 = vcvt.s32.f32 %v131
    %v139 = vmul.f32 %v138, %v136
    %v140 = vxor.u32 %v139, 2147483648
    %v141 = vsel %vm58, %v140, %v139
    %v142 = vsub.s32 4, %v118
    %v143 = vsel %vm58, %v142, %v118
    %v144 = vsel %vm57, %v54, %v141
    %v145 = vsel %vm57, 0, %v143
    %v146 = vcosq.f32.pop %v144
    %v147 = vsinq.f32.pop %v144
    %vm148 = vweird.f32 %v54
    %v149 = vand.u32 %v145, 3
    %vm150 = vcmp.lt.s32.totalorder %v149, 2
    %vm151 = vcmp.eq.s32.totalorder %v149, 0
    %v152 = vxor.u32 %v147, 2147483648
    %v153 = vsel %vm151, %v146, %v152
    %vm154 = vcmp.eq.s32.totalorder %v149, 2
    %v155 = vxor.u32 %v146, 2147483648
    %v156 = vsel %vm154, %v155, %v147
    %v157 = vsel %vm150, %v153, %v156
    %v158 = vsel %vm148, nan, %v157
    %v159 = vand.u32 2147483647, %v55
    %vm160 = vcmp.le.f32.partialorder %v159, 0.7853982
    %vm161 = vcmp.lt.s32.totalorder %v55, 0
    %v162 = vand.u32 %v55, 2139095040
    %v163 = vshrl.u32 %v162, 23
    %v164 = vsub.s32 %v163, 127
    %v165 = vand.u32 2147483647, %v55
    %v166 = vand.u32 %v165, 8388607
    %v167 = vor.u32 %v166, 8388608
    %v168 = vsub.s32 0, %v167
    %v169 = vadd.s32 %v164, 1
    %vm170 = vcmp.gt.s32.totalorder %v169, 0
    %v171 = vsel %vm170, %v169, 0
    %v172 = vshrl.u32 %v171, 5
    %v173 = vand.u32 %v171, 31
    %v174 = vsub.s32 32, %v173
    %v175 = vshrl.u32 683565275, %v174
    %v176 = vshll.u32 683565275, %v173
    %v177 = vshrl.u32 2475754826, %v174
    %v178 = vor.u32 %v176, %v177
    %v179 = vshll.u32 2475754826, %v173
    %v180 = vshrl.u32 2131351028, %v174
    %v181 = vor.u32 %v179, %v180
    %v182 = vshll.u32 2131351028, %v173
    %v183 = vshrl.u32 2102212464, %v174
    %v184 = vor.u32 %v182, %v183
    %v185 = vshll.u32 2102212464, %v173
    %v186 = vshrl.u32 920167782, %v174
    %v187 = vor.u32 %v185, %v186
    %v188 = vshll.u32 920167782, %v173
    %v189 = vshrl.u32 1326507024, %v174
    %v190 = vor.u32 %v188, %v189
    %vm191 = vcmp.lt.s32.totalorder %v172, 1
    %vm192 = vcmp.lt.s32.totalorder %v172, 2
    %vm193 = vcmp.lt.s32.totalorder %v172, 3
    %vm194 = vcmp.lt.s32.totalorder %v172, 4
    %v195 = vsel %vm191, %v175, %v178
    %v196 = vsel %vm194, %v184, 2102212464
    %v197 = vsel %vm193, %v181, %v196
    %v198 = vsel %vm192, %v195, %v197
    %v199 = vsel %vm191, %v178, %v181
    %v200 = vsel %vm194, %v187, 920167782
    %v201 = vsel %vm193, %v184, %v200
    %v202 = vsel %vm192, %v199, %v201
    %v203 = vsel %vm191, %v181, %v184
    %v204 = vsel %vm194, %v190, 1326507024
    %v205 = vsel %vm193, %v187, %v204
    %v206 = vsel %vm192, %v203, %v205
    %v207 = vshll.u32 %v167, 8
    %v208 = vmul.u32.u64.compose %v207, %v206
    %v209 = vextract.low.u32 %v208
    %v210 = vextract.high.u32 %v208
    %v211 = vmul.u32.u64.compose %v207, %v202
    %v212 = vextract.low.u32 %v211
    %v213 = vextract.high.u32 %v211
    %v214 = vmul.u32 %v207, %v198
    %v215 = vadd.s32 %v210, %v212
    %vm216 = vc.u32 %v210, %v212
    %v217 = vadd.s32 %v213, 1
    %v218 = vsel %vm216, %v217, %v213
    %v219 = vadd.s32 %v214, %v218
    %v220 = vadd.s32 %v219, 536870912
    %v221 = vshrl.u32 %v220, 30
    %v222 = vshll.u32 %v221, 30
    %v223 = vsub.s32 %v219, %v222
    %vm224 = vcmp.lt.s32.totalorder %v223, 0
    %v225 = vsub.s32 0, %v223
    %v226 = vsel %vm224, %v225, %v223
    %v227 = vclz %v226
    %v228 = vsub.s32 %v227, 2
    %vm229 = vcmp.gt.s32.totalorder 0, %v228
    %v230 = vsel %vm229, 0, %v228
    %v231 = vsub.s32 32, %v230
    %v232 = vshll.u32 %v223, %v230
    %v233 = vshrl.u32 %v215, %v231
    %v234 = vor.u32 %v232, %v233
    %v235 = vsub.s32 4294967266, %v230
    %v236 = vadd.s32 %v235, 127
    %v237 = vshll.u32 %v236, 23
    %v238 = vor.u32 4788187, %v237
    %v239 = vand.u32 2147483647, %v238
    %v241 = vcvt.s32.f32 %v234
    %v242 = vmul.f32 %v241, %v239
    %v243 = vxor.u32 %v242, 2147483648
    %v244 = vsel %vm161, %v243, %v242
    %v245 = vsub.s32 4, %v221
    %v246 = vsel %vm161, %v245, %v221
    %v247 = vsel %vm160, %v55, %v244
    %v248 = vsel %vm160, 0, %v246
    %v249 = vcosq.f32.pop %v247
    %v250 = vsinq.f32.pop %v247
    %vm251 = vweird.f32 %v55
    %v252 = vand.u32 %v248, 3
    %vm253 = vcmp.lt.s32.totalorder %v252, 2
    %vm254 = vcmp.eq.s32.totalorder %v252, 0
    %v255 = vxor.u32 %v250, 2147483648
    %v256 = vsel %vm254, %v249, %v255
    %vm257 = vcmp.eq.s32.totalorder %v252, 2
    %v258 = vxor.u32 %v249, 2147483648
    %v259 = vsel %vm257, %v258, %v250
    %v260 = vsel %vm253, %v256, %v259
    %v261 = vsel %vm251, nan, %v260
    %v262 = vand.u32 2147483647, %v54
    %vm263 = vcmp.le.f32.partialorder %v262, 0.7853982
    %vm264 = vcmp.lt.s32.totalorder %v54, 0
    %v265 = vand.u32 %v54, 2139095040
    %v266 = vshrl.u32 %v265, 23
    %v267 = vsub.s32 %v266, 127
    %v268 = vand.u32 2147483647, %v54
    %v269 = vand.u32 %v268, 8388607
    %v270 = vor.u32 %v269, 8388608
    %v271 = vsub.s32 0, %v270
    %v272 = vadd.s32 %v267, 1
    %vm273 = vcmp.gt.s32.totalorder %v272, 0
    %v274 = vsel %vm273, %v272, 0
    %v275 = vshrl.u32 %v274, 5
    %v276 = vand.u32 %v274, 31
    %v277 = vsub.s32 32, %v276
    %v278 = vshrl.u32 683565275, %v277
    %v279 = vshll.u32 683565275, %v276
    %v280 = vshrl.u32 2475754826, %v277
    %v281 = vor.u32 %v279, %v280
    %v282 = vshll.u32 2475754826, %v276
    %v283 = vshrl.u32 2131351028, %v277
    %v284 = vor.u32 %v282, %v283
    %v285 = vshll.u32 2131351028, %v276
    %v286 = vshrl.u32 2102212464, %v277
    %v287 = vor.u32 %v285, %v286
    %v288 = vshll.u32 2102212464, %v276
    %v289 = vshrl.u32 920167782, %v277
    %v290 = vor.u32 %v288, %v289
    %v291 = vshll.u32 920167782, %v276
    %v292 = vshrl.u32 1326507024, %v277
    %v293 = vor.u32 %v291, %v292
    %vm294 = vcmp.lt.s32.totalorder %v275, 1
    %vm295 = vcmp.lt.s32.totalorder %v275, 2
    %vm296 = vcmp.lt.s32.totalorder %v275, 3
    %vm297 = vcmp.lt.s32.totalorder %v275, 4
    %v298 = vsel %vm294, %v278, %v281
    %v299 = vsel %vm297, %v287, 2102212464
    %v300 = vsel %vm296, %v284, %v299
    %v301 = vsel %vm295, %v298, %v300
    %v302 = vsel %vm294, %v281, %v284
    %v303 = vsel %vm297, %v290, 920167782
    %v304 = vsel %vm296, %v287, %v303
    %v305 = vsel %vm295, %v302, %v304
    %v306 = vsel %vm294, %v284, %v287
    %v307 = vsel %vm297, %v293, 1326507024
    %v308 = vsel %vm296, %v290, %v307
    %v309 = vsel %vm295, %v306, %v308
    %v310 = vshll.u32 %v270, 8
    %v311 = vmul.u32.u64.compose %v310, %v309
    %v312 = vextract.low.u32 %v311
    %v313 = vextract.high.u32 %v311
    %v314 = vmul.u32.u64.compose %v310, %v305
    %v315 = vextract.low.u32 %v314
    %v316 = vextract.high.u32 %v314
    %v317 = vmul.u32 %v310, %v301
    %v318 = vadd.s32 %v313, %v315
    %vm319 = vc.u32 %v313, %v315
    %v320 = vadd.s32 %v316, 1
    %v321 = vsel %vm319, %v320, %v316
    %v322 = vadd.s32 %v317, %v321
    %v323 = vadd.s32 %v322, 536870912
    %v324 = vshrl.u32 %v323, 30
    %v325 = vshll.u32 %v324, 30
    %v326 = vsub.s32 %v322, %v325
    %vm327 = vcmp.lt.s32.totalorder %v326, 0
    %v328 = vsub.s32 0, %v326
    %v329 = vsel %vm327, %v328, %v326
    %v330 = vclz %v329
    %v331 = vsub.s32 %v330, 2
    %vm332 = vcmp.gt.s32.totalorder 0, %v331
    %v333 = vsel %vm332, 0, %v331
    %v334 = vsub.s32 32, %v333
    %v335 = vshll.u32 %v326, %v333
    %v336 = vshrl.u32 %v318, %v334
    %v337 = vor.u32 %v335, %v336
    %v338 = vsub.s32 4294967266, %v333
    %v339 = vadd.s32 %v338, 127
    %v340 = vshll.u32 %v339, 23
    %v341 = vor.u32 4788187, %v340
    %v342 = vand.u32 2147483647, %v341
    %v344 = vcvt.s32.f32 %v337
    %v345 = vmul.f32 %v344, %v342
    %v346 = vxor.u32 %v345, 2147483648
    %v347 = vsel %vm264, %v346, %v345
    %v348 = vsub.s32 4, %v324
    %v349 = vsel %vm264, %v348, %v324
    %v350 = vsel %vm263, %v54, %v347
    %v351 = vsel %vm263, 0, %v349
    %v352 = vcosq.f32.pop %v350
    %v353 = vsinq.f32.pop %v350
    %vm354 = vweird.f32 %v54
    %v355 = vadd.s32 %v351, 3
    %v356 = vand.u32 %v355, 3
    %vm357 = vcmp.lt.s32.totalorder %v356, 2
    %vm358 = vcmp.eq.s32.totalorder %v356, 0
    %v359 = vxor.u32 %v353, 2147483648
    %v360 = vsel %vm358, %v352, %v359
    %vm361 = vcmp.eq.s32.totalorder %v356, 2
    %v362 = vxor.u32 %v352, 2147483648
    %v363 = vsel %vm361, %v362, %v353
    %v364 = vsel %vm357, %v360, %v363
    %v365 = vsel %vm354, nan, %v364
    %v366 = vand.u32 2147483647, %v55
    %vm367 = vcmp.le.f32.partialorder %v366, 0.7853982
    %vm368 = vcmp.lt.s32.totalorder %v55, 0
    %v369 = vand.u32 %v55, 2139095040
    %v370 = vshrl.u32 %v369, 23
    %v371 = vsub.s32 %v370, 127
    %v372 = vand.u32 2147483647, %v55
    %v373 = vand.u32 %v372, 8388607
    %v374 = vor.u32 %v373, 8388608
    %v375 = vsub.s32 0, %v374
    %v376 = vadd.s32 %v371, 1
    %vm377 = vcmp.gt.s32.totalorder %v376, 0
    %v378 = vsel %vm377, %v376, 0
    %v379 = vshrl.u32 %v378, 5
    %v380 = vand.u32 %v378, 31
    %v381 = vsub.s32 32, %v380
    %v382 = vshrl.u32 683565275, %v381
    %v383 = vshll.u32 683565275, %v380
    %v384 = vshrl.u32 2475754826, %v381
    %v385 = vor.u32 %v383, %v384
    %v386 = vshll.u32 2475754826, %v380
    %v387 = vshrl.u32 2131351028, %v381
    %v388 = vor.u32 %v386, %v387
    %v389 = vshll.u32 2131351028, %v380
    %v390 = vshrl.u32 2102212464, %v381
    %v391 = vor.u32 %v389, %v390
    %v392 = vshll.u32 2102212464, %v380
    %v393 = vshrl.u32 920167782, %v381
    %v394 = vor.u32 %v392, %v393
    %v395 = vshll.u32 920167782, %v380
    %v396 = vshrl.u32 1326507024, %v381
    %v397 = vor.u32 %v395, %v396
    %vm398 = vcmp.lt.s32.totalorder %v379, 1
    %vm399 = vcmp.lt.s32.totalorder %v379, 2
    %vm400 = vcmp.lt.s32.totalorder %v379, 3
    %vm401 = vcmp.lt.s32.totalorder %v379, 4
    %v402 = vsel %vm398, %v382, %v385
    %v403 = vsel %vm401, %v391, 2102212464
    %v404 = vsel %vm400, %v388, %v403
    %v405 = vsel %vm399, %v402, %v404
    %v406 = vsel %vm398, %v385, %v388
    %v407 = vsel %vm401, %v394, 920167782
    %v408 = vsel %vm400, %v391, %v407
    %v409 = vsel %vm399, %v406, %v408
    %v410 = vsel %vm398, %v388, %v391
    %v411 = vsel %vm401, %v397, 1326507024
    %v412 = vsel %vm400, %v394, %v411
    %v413 = vsel %vm399, %v410, %v412
    %v414 = vshll.u32 %v374, 8
    %v415 = vmul.u32.u64.compose %v414, %v413
    %v416 = vextract.low.u32 %v415
    %v417 = vextract.high.u32 %v415
    %v418 = vmul.u32.u64.compose %v414, %v409
    %v419 = vextract.low.u32 %v418
    %v420 = vextract.high.u32 %v418
    %v421 = vmul.u32 %v414, %v405
    %v422 = vadd.s32 %v417, %v419
    %vm423 = vc.u32 %v417, %v419
    %v424 = vadd.s32 %v420, 1
    %v425 = vsel %vm423, %v424, %v420
    %v426 = vadd.s32 %v421, %v425
    %v427 = vadd.s32 %v426, 536870912
    %v428 = vshrl.u32 %v427, 30
    %v429 = vshll.u32 %v428, 30
    %v430 = vsub.s32 %v426, %v429
    %vm431 = vcmp.lt.s32.totalorder %v430, 0
    %v432 = vsub.s32 0, %v430
    %v433 = vsel %vm431, %v432, %v430
    %v434 = vclz %v433
    %v435 = vsub.s32 %v434, 2
    %vm436 = vcmp.gt.s32.totalorder 0, %v435
    %v437 = vsel %vm436, 0, %v435
    %v438 = vsub.s32 32, %v437
    %v439 = vshll.u32 %v430, %v437
    %v440 = vshrl.u32 %v422, %v438
    %v441 = vor.u32 %v439, %v440
    %v442 = vsub.s32 4294967266, %v437
    %v443 = vadd.s32 %v442, 127
    %v444 = vshll.u32 %v443, 23
    %v445 = vor.u32 4788187, %v444
    %v446 = vand.u32 2147483647, %v445
    %v448 = vcvt.s32.f32 %v441
    %v449 = vmul.f32 %v448, %v446
    %v450 = vxor.u32 %v449, 2147483648
    %v451 = vsel %vm368, %v450, %v449
    %v452 = vsub.s32 4, %v428
    %v453 = vsel %vm368, %v452, %v428
    %v454 = vsel %vm367, %v55, %v451
    %v455 = vsel %vm367, 0, %v453
    %v456 = vcosq.f32.pop %v454
    %v457 = vsinq.f32.pop %v454
    %vm458 = vweird.f32 %v55
    %v459 = vadd.s32 %v455, 3
    %v460 = vand.u32 %v459, 3
    %vm461 = vcmp.lt.s32.totalorder %v460, 2
    %vm462 = vcmp.eq.s32.totalorder %v460, 0
    %v463 = vxor.u32 %v457, 2147483648
    %v464 = vsel %vm462, %v456, %v463
    %vm465 = vcmp.eq.s32.totalorder %v460, 2
    %v466 = vxor.u32 %v456, 2147483648
    %v467 = vsel %vm465, %v466, %v457
    %v468 = vsel %vm461, %v464, %v467
    %v469 = vsel %vm458, nan, %v468
    %472 = vrot.lane.b32.xlu0 %v158, 4
    %v473 = vpop.permute.xlu0 %472
    %474 = vrot.lane.b32.xlu0 %v261, 4
    %v475 = vpop.permute.xlu0 %474
    %vm478 = vcmask 31744
    %v479 = vsel %vm478, %v158, %v473
    %v480 = vsel %vm478, %v261, %v475
    %483 = vrot.lane.b32.xlu0 %v365, 4
    %v484 = vpop.permute.xlu0 %483
    %485 = vrot.lane.b32.xlu0 %v469, 4
    %v486 = vpop.permute.xlu0 %485
    %v489 = vsel %vm478, %v365, %v484
    %v490 = vsel %vm478, %v469, %v486
    %v491 = vsub.f32 0.0, %v365
    %v492 = vsub.f32 0.0, %v469
    %v493 = vsel %vm478, %v491, %v484
    %v494 = vsel %vm478, %v492, %v486
    %497 = vrot.lane.b32.xlu0 %v479, 8
    %v498 = vpop.permute.xlu0 %497
    %499 = vrot.lane.b32.xlu0 %v480, 8
    %v500 = vpop.permute.xlu0 %499
    %503 = vrot.lane.b32.xlu0 %v479, 16
    %v504 = vpop.permute.xlu0 %503
    %505 = vrot.lane.b32.xlu0 %v480, 16
    %v506 = vpop.permute.xlu0 %505
    %509 = vrot.lane.b32.xlu0 %v479, 24
    %v510 = vpop.permute.xlu0 %509
    %511 = vrot.lane.b32.xlu0 %v480, 24
    %v512 = vpop.permute.xlu0 %511
    %vm515 = vcmask 64512
    %v516 = vsel %vm515, %v479, %v498
    %v517 = vsel %vm515, %v480, %v500
    %vm518 = vcmask 130048
    %v519 = vsel %vm518, %v516, %v504
    %v520 = vsel %vm518, %v517, %v506
    %vm521 = vcmask 195584
    %v522 = vsel %vm521, %v519, %v510
    %v523 = vsel %vm521, %v520, %v512
    %526 = vrot.lane.b32.xlu0 %v493, 8
    %v527 = vpop.permute.xlu0 %526
    %528 = vrot.lane.b32.xlu0 %v494, 8
    %v529 = vpop.permute.xlu0 %528
    %532 = vrot.lane.b32.xlu0 %v493, 16
    %v533 = vpop.permute.xlu0 %532
    %534 = vrot.lane.b32.xlu0 %v494, 16
    %v535 = vpop.permute.xlu0 %534
    %538 = vrot.lane.b32.xlu0 %v493, 24
    %v539 = vpop.permute.xlu0 %538
    %540 = vrot.lane.b32.xlu0 %v494, 24
    %v541 = vpop.permute.xlu0 %540
    %v544 = vsel %vm515, %v493, %v527
    %v545 = vsel %vm515, %v494, %v529
    %v546 = vsel %vm518, %v544, %v533
    %v547 = vsel %vm518, %v545, %v535
    %v548 = vsel %vm521, %v546, %v539
    %v549 = vsel %vm521, %v547, %v541
    %vm550 = vcmask 261120
    %v552 = vsel %vm550, %v24, 0
    %v555 = vsel %vm550, %v25, 0
    %v558 = vsel %vm550, %v26, 0
    %v561 = vsel %vm550, %v27, 0
    %v564 = vsel %vm550, %v28, 0
    %v567 = vsel %vm550, %v29, 0
    %v570 = vsel %vm550, %v30, 0
    %v573 = vsel %vm550, %v31, 0
    %v576 = vsel %vm550, %v32, 0
    %v579 = vsel %vm550, %v33, 0
    %581 = vmatprep.subr.mxu0 0.0
    %582 = vmatpush1.xpose.msra.mxu0 0.0
    %583 = vmatprep.subr.mxu0 0.0
    %584 = vmatpush1.xpose.msra.mxu0 0.0
    %585 = vmatprep.subr.mxu0 0.0
    %586 = vmatpush1.xpose.msra.mxu0 0.0
    %587 = vmatprep.subr.mxu0 0.0
    %588 = vmatpush1.xpose.msra.mxu0 0.0
    %589 = vmatprep.subr.mxu0 0.0
    %590 = vmatpush1.xpose.msra.mxu0 0.0
    %591 = vmatprep.subr.mxu0 0.0
    %592 = vmatpush1.xpose.msra.mxu0 0.0
    %593 = vmatprep.subr.mxu0 0.0
    %594 = vmatpush1.xpose.msra.mxu0 0.0
    %595 = vmatprep.subr.mxu0 0.0
    %596 = vmatpush1.xpose.msra.mxu0 0.0
    %597 = vmatprep.subr.mxu0 0.0
    %598 = vmatpush1.xpose.msra.mxu0 %v579
    %599 = vmatprep.subr.mxu0 0.0
    %600 = vmatpush1.xpose.msra.mxu0 %v576
    %601 = vmatprep.subr.mxu0 0.0
    %602 = vmatpush1.xpose.msra.mxu0 %v573
    %603 = vmatprep.subr.mxu0 0.0
    %604 = vmatpush1.xpose.msra.mxu0 %v570
    %605 = vmatprep.subr.mxu0 0.0
    %606 = vmatpush1.xpose.msra.mxu0 %v567
    %607 = vmatprep.subr.mxu0 0.0
    %608 = vmatpush1.xpose.msra.mxu0 %v564
    %609 = vmatprep.subr.mxu0 0.0
    %610 = vmatpush1.xpose.msra.mxu0 %v561
    %611 = vmatprep.subr.mxu0 0.0
    %612 = vmatpush1.xpose.msra.mxu0 %v558
    %613 = vmatprep.subr.mxu0 0.0
    %614 = vmatpush2.xpose.msra.mxu0 0.0
    %615 = vmatprep.subr.mxu0 0.0
    %616 = vmatpush2.xpose.msra.mxu0 0.0
    %617 = vmatprep.subr.mxu0 0.0
    %618 = vmatpush2.xpose.msra.mxu0 0.0
    %619 = vmatprep.subr.mxu0 0.0
    %620 = vmatpush2.xpose.msra.mxu0 0.0
    %621 = vmatprep.subr.mxu0 0.0
    %622 = vmatpush2.xpose.msra.mxu0 0.0
    %623 = vmatprep.subr.mxu0 0.0
    %624 = vmatpush2.xpose.msra.mxu0 0.0
    %625 = vmatprep.subr.mxu0 0.0
    %626 = vmatpush2.xpose.msra.mxu0 0.0
    %627 = vmatprep.subr.mxu0 0.0
    %628 = vmatpush2.xpose.msra.mxu0 0.0
    %629 = vmatprep.subr.mxu0 0.0
    %630 = vmatpush2.xpose.msra.mxu0 0.0
    %631 = vmatprep.subr.mxu0 0.0
    %632 = vmatpush2.xpose.msra.mxu0 0.0
    %633 = vmatprep.subr.mxu0 0.0
    %634 = vmatpush2.xpose.msra.mxu0 0.0
    %635 = vmatprep.subr.mxu0 0.0
    %636 = vmatpush2.xpose.msra.mxu0 0.0
    %637 = vmatprep.subr.mxu0 0.0
    %638 = vmatpush2.xpose.msra.mxu0 0.0
    %639 = vmatprep.subr.mxu0 0.0
    %640 = vmatpush2.xpose.msra.mxu0 0.0
    %641 = vmatprep.subr.mxu0 0.0
    %642 = vmatpush2.xpose.msra.mxu0 0.0
    %643 = vmatprep.subr.mxu0 0.0
    %644 = vmatpush2.xpose.msra.mxu0 0.0
    %645 = vmatprep.mubr.f32.mxu0 0.0
    %646 = vmatmul.mubr.f32.gmra.mxu0 %v552
    %v647 = vpop.f32.mrf.mxu0
    %v648 = vadd.f32 0.0, %v647
    %v649 = vpop.f32.mrf.mxu0
    %650 = vmatprep.mubr.f32.mxu0 0.0
    %651 = vmatmul.mubr.f32.gmra.mxu0 %v555
    %v652 = vpop.f32.mrf.mxu0
    %v653 = vadd.f32 0.0, %v652
    %v654 = vpop.f32.mrf.mxu0
    %655 = vdwg.mxu0
    %v656 = vmul.f32 %v648, %v522
    %v657 = vmul.f32 %v653, %v523
    %v658 = vlaneseq
    %v659 = vand.u32 %v658, 127
    %vm660 = vcmp.lt.s32.totalorder %v659, 0
    %v661 = vsub.s32 0, %v659
    %v662 = vsel %vm660, %v661, %v659
    %v663 = vshrl.u32 %v662, 3
    %v664 = vand.u32 %v662, 7
    %v665 = vsub.s32 0, %v664
    %v666 = vsel %vm660, %v665, %v664
    %vm667 = vcmp.ne.s32.totalorder %v666, 0
    %vm668 = vcmp.lt.s32.totalorder %v666, 0
    %vm669 = vmand %vm668, %vm667
    %v670 = vadd.s32 %v666, 8
    %v671 = vsel %vm669, %v670, %v666
    %vm672 = vcmp.lt.s32.totalorder %v671, 4
    %675 = vrot.lane.b32.xlu0 %v648, 124
    %v676 = vpop.permute.xlu0 %675
    %677 = vrot.lane.b32.xlu0 %v653, 124
    %v678 = vpop.permute.xlu0 %677
    %681 = vrot.lane.b32.xlu0 %v648, 28
    %v682 = vpop.permute.xlu0 %681
    %683 = vrot.lane.b32.xlu0 %v653, 28
    %v684 = vpop.permute.xlu0 %683
    %vm687 = vcmask 228352
    %v688 = vsel %vm687, %v676, %v682
    %v689 = vsel %vm687, %v678, %v684
    %690 = vrot.lane.b32.xlu0 %v648, 100
    %v691 = vpop.permute.xlu0 %690
    %692 = vrot.lane.b32.xlu0 %v653, 100
    %v693 = vpop.permute.xlu0 %692
    %696 = vrot.lane.b32.xlu0 %v648, 4
    %v697 = vpop.permute.xlu0 %696
    %698 = vrot.lane.b32.xlu0 %v653, 4
    %v699 = vpop.permute.xlu0 %698
    %v702 = vsel %vm478, %v691, %v697
    %v703 = vsel %vm478, %v693, %v699
    %v704 = vsel %vm672, %v688, %v702
    %v705 = vsel %vm672, %v689, %v703
    %v706 = vmul.f32 %v704, %v548
    %v707 = vmul.f32 %v705, %v549
    %v708 = vadd.f32 %v656, %v706
    %v709 = vadd.f32 %v657, %v707
    %712 = vrot.lane.b32.xlu0 %v522, 32
    %v713 = vpop.permute.xlu0 %712
    %714 = vrot.lane.b32.xlu0 %v523, 32
    %v715 = vpop.permute.xlu0 %714
    %v718 = vmul.f32 %v648, %v713
    %v719 = vmul.f32 %v653, %v715
    %720 = vrot.lane.b32.xlu0 %v648, 92
    %v721 = vpop.permute.xlu0 %720
    %722 = vrot.lane.b32.xlu0 %v653, 92
    %v723 = vpop.permute.xlu0 %722
    %726 = vrot.lane.b32.xlu0 %v648, 108
    %v727 = vpop.permute.xlu0 %726
    %728 = vrot.lane.b32.xlu0 %v653, 108
    %v729 = vpop.permute.xlu0 %728
    %vm732 = vcmask 97280
    %v733 = vsel %vm732, %v721, %v727
    %v734 = vsel %vm732, %v723, %v729
    %735 = vrot.lane.b32.xlu0 %v648, 84
    %v736 = vpop.permute.xlu0 %735
    %737 = vrot.lane.b32.xlu0 %v653, 84
    %v738 = vpop.permute.xlu0 %737
    %v741 = vsel %vm478, %v736, %v691
    %v742 = vsel %vm478, %v738, %v693
    %v743 = vsel %vm672, %v733, %v741
    %v744 = vsel %vm672, %v734, %v742
    %v745 = vmul.f32 %v743, %v548
    %v746 = vmul.f32 %v744, %v549
    %749 = vrot.lane.b32.xlu0 %v745, 32
    %v750 = vpop.permute.xlu0 %749
    %751 = vrot.lane.b32.xlu0 %v746, 32
    %v752 = vpop.permute.xlu0 %751
    %v755 = vadd.f32 %v718, %v750
    %v756 = vadd.f32 %v719, %v752
    %v757 = vmul.f32 %v755, 0.35355338
    %v758 = vmul.f32 %v756, 0.35355338
    %v759 = vlaneseq
    %v760 = vshrl.u32 %v759, 7
    %v761 = vadd.s32 %v760, 8
    %vm762 = vcmp.lt.s32.totalorder %v760, 0
    %v763 = vsub.s32 0, %v760
    %v764 = vsel %vm762, %v763, %v760
    %v765 = vshrl.u32 %v764, 3
    %v766 = vand.u32 %v764, 7
    %v767 = vsub.s32 0, %v766
    %v768 = vsel %vm762, %v767, %v766
    %vm769 = vcmp.lt.s32.totalorder %v761, 0
    %v770 = vsub.s32 0, %v761
    %v771 = vsel %vm769, %v770, %v761
    %v772 = vshrl.u32 %v771, 3
    %v773 = vand.u32 %v771, 7
    %v774 = vsub.s32 0, %v773
    %v775 = vsel %vm769, %v774, %v773
    %vm776 = vcmp.ne.s32.totalorder %v768, 0
    %vm777 = vcmp.ne.s32.totalorder %v775, 0
    %vm778 = vcmp.lt.s32.totalorder %v768, 0
    %vm779 = vcmp.lt.s32.totalorder %v775, 0
    %vm780 = vmand %vm778, %vm776
    %vm781 = vmand %vm779, %vm777
    %v782 = vadd.s32 %v768, 8
    %v783 = vadd.s32 %v775, 8
    %v784 = vsel %vm780, %v782, %v768
    %v785 = vsel %vm781, %v783, %v775
    %vm786 = vcmp.le.s32.totalorder %v659, %v784
    %vm787 = vcmp.le.s32.totalorder %v659, %v785
    %789 = vrot.lane.b32.xlu0 %v708, 120
    %v790 = vpop.permute.xlu0 %789
    %792 = vrot.lane.b32.xlu0 %v757, 96
    %v793 = vpop.permute.xlu0 %792
    %v794 = vsel %vm515, %v708, 0
    %v796 = vsel %vm515, %v790, 0
    %v798 = vsel %vm515, %v793, 0
    %800 = vmatprep.subr.mxu0 0.0
    %801 = vmatpush1.xpose.msra.mxu0 0.0
    %802 = vmatprep.subr.mxu0 0.0
    %803 = vmatpush1.xpose.msra.mxu0 0.0
    %804 = vmatprep.subr.mxu0 0.0
    %805 = vmatpush1.xpose.msra.mxu0 0.0
    %806 = vmatprep.subr.mxu0 0.0
    %807 = vmatpush1.xpose.msra.mxu0 0.0
    %808 = vmatprep.subr.mxu0 0.0
    %809 = vmatpush1.xpose.msra.mxu0 0.0
    %810 = vmatprep.subr.mxu0 0.0
    %811 = vmatpush1.xpose.msra.mxu0 0.0
    %812 = vmatprep.subr.mxu0 0.0
    %813 = vmatpush1.xpose.msra.mxu0 0.0
    %814 = vmatprep.subr.mxu0 0.0
    %815 = vmatpush1.xpose.msra.mxu0 0.0
    %816 = vmatprep.subr.mxu0 0.0
    %817 = vmatpush1.xpose.msra.mxu0 0.0
    %818 = vmatprep.subr.mxu0 0.0
    %819 = vmatpush1.xpose.msra.mxu0 0.0
    %820 = vmatprep.subr.mxu0 0.0
    %821 = vmatpush1.xpose.msra.mxu0 0.0
    %822 = vmatprep.subr.mxu0 0.0
    %823 = vmatpush1.xpose.msra.mxu0 0.0
    %824 = vmatprep.subr.mxu0 0.0
    %825 = vmatpush1.xpose.msra.mxu0 0.0
    %826 = vmatprep.subr.mxu0 0.0
    %827 = vmatpush1.xpose.msra.mxu0 0.0
    %828 = vmatprep.subr.mxu0 0.0
    %829 = vmatpush1.xpose.msra.mxu0 0.0
    %830 = vmatprep.subr.mxu0 0.0
    %831 = vmatpush1.xpose.msra.mxu0 %v798
    %832 = vmatprep.subr.mxu0 0.0
    %833 = vmatpush2.xpose.msra.mxu0 0.0
    %834 = vmatprep.subr.mxu0 0.0
    %835 = vmatpush2.xpose.msra.mxu0 0.0
    %836 = vmatprep.subr.mxu0 0.0
    %837 = vmatpush2.xpose.msra.mxu0 0.0
    %838 = vmatprep.subr.mxu0 0.0
    %839 = vmatpush2.xpose.msra.mxu0 0.0
    %840 = vmatprep.subr.mxu0 0.0
    %841 = vmatpush2.xpose.msra.mxu0 0.0
    %842 = vmatprep.subr.mxu0 0.0
    %843 = vmatpush2.xpose.msra.mxu0 0.0
    %844 = vmatprep.subr.mxu0 0.0
    %845 = vmatpush2.xpose.msra.mxu0 0.0
    %846 = vmatprep.subr.mxu0 0.0
    %847 = vmatpush2.xpose.msra.mxu0 0.0
    %848 = vmatprep.subr.mxu0 0.0
    %849 = vmatpush2.xpose.msra.mxu0 0.0
    %850 = vmatprep.subr.mxu0 0.0
    %851 = vmatpush2.xpose.msra.mxu0 0.0
    %852 = vmatprep.subr.mxu0 0.0
    %853 = vmatpush2.xpose.msra.mxu0 0.0
    %854 = vmatprep.subr.mxu0 0.0
    %855 = vmatpush2.xpose.msra.mxu0 0.0
    %856 = vmatprep.subr.mxu0 0.0
    %857 = vmatpush2.xpose.msra.mxu0 0.0
    %858 = vmatprep.subr.mxu0 0.0
    %859 = vmatpush2.xpose.msra.mxu0 0.0
    %860 = vmatprep.subr.mxu0 0.0
    %861 = vmatpush2.xpose.msra.mxu0 0.0
    %862 = vmatprep.subr.mxu0 0.0
    %863 = vmatpush2.xpose.msra.mxu0 0.0
    %864 = vmatprep.mubr.f32.mxu0 0.0
    %865 = vmatmul.mubr.f32.gmra.mxu0 %v794
    %v866 = vpop.f32.mrf.mxu0
    %v867 = vadd.f32 0.0, %v866
    %v868 = vpop.f32.mrf.mxu0
    %869 = vmatprep.mubr.f32.mxu0 0.0
    %870 = vmatmul.mubr.f32.gmra.mxu0 %v796
    %v871 = vpop.f32.mrf.mxu0
    %v872 = vadd.f32 0.0, %v871
    %v873 = vpop.f32.mrf.mxu0
    %874 = vdwg.mxu0
    %v875 = vsel %vm786, %v867, -1e+30
    %v876 = vsel %vm787, %v872, -1e+30
    %v877 = vsel %vm515, %v875, -inf
    %878 = vmax.xlane.f32.xlu0 %v877
    %v879 = vpop.xlane.xlu0 %878
    %v880 = vsel %vm515, %v876, -inf
    %881 = vmax.xlane.f32.xlu0 %v880
    %v882 = vpop.xlane.xlu0 %881
    %v883 = vsub.f32 %v875, %v879
    %v884 = vsub.f32 %v876, %v882
    %v885 = vmul.f32 %v883, 1.442695
    %v886 = vpow.pop %v885
    %v887 = vmul.f32 %v884, 1.442695
    %v888 = vpow.pop %v887
    %v889 = vsel %vm515, %v886, 0.0
    %890 = vadd.xlane.f32.xlu0 %v889
    %v891 = vpop.xlane.xlu0 %890
    %v892 = vsel %vm515, %v888, 0.0
    %893 = vadd.xlane.f32.xlu0 %v892
    %v894 = vpop.xlane.xlu0 %893
    %v895 = vrcp.pop %v891
    %v896 = vmul.f32 %v886, %v895
    %v897 = vrcp.pop %v894
    %v898 = vmul.f32 %v888, %v897
    %899 = vrot.lane.b32.xlu0 %v648, 80
    %v900 = vpop.permute.xlu0 %899
    %v903 = vsel %vm515, %v896, 0
    %v906 = vsel %vm515, %v898, 0
    %908 = vmatprep.subr.mxu0 0.0
    %909 = vmatpush1.msra.mxu0 0.0
    %910 = vmatprep.subr.mxu0 0.0
    %911 = vmatpush1.msra.mxu0 0.0
    %912 = vmatprep.subr.mxu0 0.0
    %913 = vmatpush1.msra.mxu0 0.0
    %914 = vmatprep.subr.mxu0 0.0
    %915 = vmatpush1.msra.mxu0 0.0
    %916 = vmatprep.subr.mxu0 0.0
    %917 = vmatpush1.msra.mxu0 0.0
    %918 = vmatprep.subr.mxu0 0.0
    %919 = vmatpush1.msra.mxu0 0.0
    %920 = vmatprep.subr.mxu0 0.0
    %921 = vmatpush1.msra.mxu0 0.0
    %922 = vmatprep.subr.mxu0 0.0
    %923 = vmatpush1.msra.mxu0 0.0
    %924 = vmatprep.subr.mxu0 0.0
    %925 = vmatpush1.msra.mxu0 0.0
    %926 = vmatprep.subr.mxu0 0.0
    %927 = vmatpush1.msra.mxu0 0.0
    %928 = vmatprep.subr.mxu0 0.0
    %929 = vmatpush1.msra.mxu0 0.0
    %930 = vmatprep.subr.mxu0 0.0
    %931 = vmatpush1.msra.mxu0 0.0
    %932 = vmatprep.subr.mxu0 0.0
    %933 = vmatpush1.msra.mxu0 0.0
    %934 = vmatprep.subr.mxu0 0.0
    %935 = vmatpush1.msra.mxu0 0.0
    %936 = vmatprep.subr.mxu0 0.0
    %937 = vmatpush1.msra.mxu0 0.0
    %938 = vmatprep.subr.mxu0 0.0
    %939 = vmatpush1.msra.mxu0 %v900
    %940 = vmatprep.subr.mxu0 0.0
    %941 = vmatpush2.msra.mxu0 0.0
    %942 = vmatprep.subr.mxu0 0.0
    %943 = vmatpush2.msra.mxu0 0.0
    %944 = vmatprep.subr.mxu0 0.0
    %945 = vmatpush2.msra.mxu0 0.0
    %946 = vmatprep.subr.mxu0 0.0
    %947 = vmatpush2.msra.mxu0 0.0
    %948 = vmatprep.subr.mxu0 0.0
    %949 = vmatpush2.msra.mxu0 0.0
    %950 = vmatprep.subr.mxu0 0.0
    %951 = vmatpush2.msra.mxu0 0.0
    %952 = vmatprep.subr.mxu0 0.0
    %953 = vmatpush2.msra.mxu0 0.0
    %954 = vmatprep.subr.mxu0 0.0
    %955 = vmatpush2.msra.mxu0 0.0
    %956 = vmatprep.subr.mxu0 0.0
    %957 = vmatpush2.msra.mxu0 0.0
    %958 = vmatprep.subr.mxu0 0.0
    %959 = vmatpush2.msra.mxu0 0.0
    %960 = vmatprep.subr.mxu0 0.0
    %961 = vmatpush2.msra.mxu0 0.0
    %962 = vmatprep.subr.mxu0 0.0
    %963 = vmatpush2.msra.mxu0 0.0
    %964 = vmatprep.subr.mxu0 0.0
    %965 = vmatpush2.msra.mxu0 0.0
    %966 = vmatprep.subr.mxu0 0.0
    %967 = vmatpush2.msra.mxu0 0.0
    %968 = vmatprep.subr.mxu0 0.0
    %969 = vmatpush2.msra.mxu0 0.0
    %970 = vmatprep.subr.mxu0 0.0
    %971 = vmatpush2.msra.mxu0 0.0
    %972 = vmatprep.mubr.f32.mxu0 0.0
    %973 = vmatmul.mubr.f32.gmra.mxu0 %v903
    %v974 = vpop.f32.mrf.mxu0
    %v975 = vadd.f32 0.0, %v974
    %v976 = vpop.f32.mrf.mxu0
    %977 = vmatprep.mubr.f32.mxu0 0.0
    %978 = vmatmul.mubr.f32.gmra.mxu0 %v906
    %v979 = vpop.f32.mrf.mxu0
    %v980 = vadd.f32 0.0, %v979
    %v981 = vpop.f32.mrf.mxu0
    %982 = vdwg.mxu0
    %987 = vrot.lane.b32.xlu0 %v34, 120
    %v988 = vpop.permute.xlu0 %987
    %989 = vrot.lane.b32.xlu0 %v35, 120
    %v990 = vpop.permute.xlu0 %989
    %991 = vrot.lane.b32.xlu0 %v36, 120
    %v992 = vpop.permute.xlu0 %991
    %993 = vrot.lane.b32.xlu0 %v37, 120
    %v994 = vpop.permute.xlu0 %993
    %v996 = vsel %vm515, %v980, 0
    %v998 = vsel %vm515, %v988, 0
    %v1000 = vsel %vm515, %v990, 0
    %v1002 = vsel %vm515, %v992, 0
    %v1004 = vsel %vm515, %v994, 0
    %1006 = vmatprep.subr.mxu0 0.0
    %1007 = vmatpush1.xpose.msra.mxu0 0.0
    %1008 = vmatprep.subr.mxu0 0.0
    %1009 = vmatpush1.xpose.msra.mxu0 0.0
    %1010 = vmatprep.subr.mxu0 0.0
    %1011 = vmatpush1.xpose.msra.mxu0 0.0
    %1012 = vmatprep.subr.mxu0 0.0
    %1013 = vmatpush1.xpose.msra.mxu0 0.0
    %1014 = vmatprep.subr.mxu0 0.0
    %1015 = vmatpush1.xpose.msra.mxu0 0.0
    %1016 = vmatprep.subr.mxu0 0.0
    %1017 = vmatpush1.xpose.msra.mxu0 0.0
    %1018 = vmatprep.subr.mxu0 0.0
    %1019 = vmatpush1.xpose.msra.mxu0 0.0
    %1020 = vmatprep.subr.mxu0 0.0
    %1021 = vmatpush1.xpose.msra.mxu0 0.0
    %1022 = vmatprep.subr.mxu0 0.0
    %1023 = vmatpush1.xpose.msra.mxu0 0.0
    %1024 = vmatprep.subr.mxu0 0.0
    %1025 = vmatpush1.xpose.msra.mxu0 0.0
    %1026 = vmatprep.subr.mxu0 0.0
    %1027 = vmatpush1.xpose.msra.mxu0 0.0
    %1028 = vmatprep.subr.mxu0 0.0
    %1029 = vmatpush1.xpose.msra.mxu0 0.0
    %1030 = vmatprep.subr.mxu0 0.0
    %1031 = vmatpush1.xpose.msra.mxu0 %v1004
    %1032 = vmatprep.subr.mxu0 0.0
    %1033 = vmatpush1.xpose.msra.mxu0 %v1002
    %1034 = vmatprep.subr.mxu0 0.0
    %1035 = vmatpush1.xpose.msra.mxu0 %v1000
    %1036 = vmatprep.subr.mxu0 0.0
    %1037 = vmatpush1.xpose.msra.mxu0 %v998
    %1038 = vmatprep.subr.mxu0 0.0
    %1039 = vmatpush2.xpose.msra.mxu0 0.0
    %1040 = vmatprep.subr.mxu0 0.0
    %1041 = vmatpush2.xpose.msra.mxu0 0.0
    %1042 = vmatprep.subr.mxu0 0.0
    %1043 = vmatpush2.xpose.msra.mxu0 0.0
    %1044 = vmatprep.subr.mxu0 0.0
    %1045 = vmatpush2.xpose.msra.mxu0 0.0
    %1046 = vmatprep.subr.mxu0 0.0
    %1047 = vmatpush2.xpose.msra.mxu0 0.0
    %1048 = vmatprep.subr.mxu0 0.0
    %1049 = vmatpush2.xpose.msra.mxu0 0.0
    %1050 = vmatprep.subr.mxu0 0.0
    %1051 = vmatpush2.xpose.msra.mxu0 0.0
    %1052 = vmatprep.subr.mxu0 0.0
    %1053 = vmatpush2.xpose.msra.mxu0 0.0
    %1054 = vmatprep.subr.mxu0 0.0
    %1055 = vmatpush2.xpose.msra.mxu0 0.0
    %1056 = vmatprep.subr.mxu0 0.0
    %1057 = vmatpush2.xpose.msra.mxu0 0.0
    %1058 = vmatprep.subr.mxu0 0.0
    %1059 = vmatpush2.xpose.msra.mxu0 0.0
    %1060 = vmatprep.subr.mxu0 0.0
    %1061 = vmatpush2.xpose.msra.mxu0 0.0
    %1062 = vmatprep.subr.mxu0 0.0
    %1063 = vmatpush2.xpose.msra.mxu0 0.0
    %1064 = vmatprep.subr.mxu0 0.0
    %1065 = vmatpush2.xpose.msra.mxu0 0.0
    %1066 = vmatprep.subr.mxu0 0.0
    %1067 = vmatpush2.xpose.msra.mxu0 0.0
    %1068 = vmatprep.subr.mxu0 0.0
    %1069 = vmatpush2.xpose.msra.mxu0 0.0
    %1070 = vmatprep.mubr.f32.mxu0 0.0
    %1071 = vmatmul.mubr.f32.gmra.mxu0 %v996
    %v1072 = vpop.f32.mrf.mxu0
    %v1073 = vadd.f32 0.0, %v1072
    %v1074 = vpop.f32.mrf.mxu0
    %1075 = vdwg.mxu0
    %v1077 = vsel %vm515, %v975, 0
    %v1079 = vsel %vm515, %v34, 0
    %v1081 = vsel %vm515, %v35, 0
    %v1083 = vsel %vm515, %v36, 0
    %v1085 = vsel %vm515, %v37, 0
    %1087 = vmatprep.subr.mxu0 0.0
    %1088 = vmatpush1.xpose.msra.mxu0 0.0
    %1089 = vmatprep.subr.mxu0 0.0
    %1090 = vmatpush1.xpose.msra.mxu0 0.0
    %1091 = vmatprep.subr.mxu0 0.0
    %1092 = vmatpush1.xpose.msra.mxu0 0.0
    %1093 = vmatprep.subr.mxu0 0.0
    %1094 = vmatpush1.xpose.msra.mxu0 0.0
    %1095 = vmatprep.subr.mxu0 0.0
    %1096 = vmatpush1.xpose.msra.mxu0 0.0
    %1097 = vmatprep.subr.mxu0 0.0
    %1098 = vmatpush1.xpose.msra.mxu0 0.0
    %1099 = vmatprep.subr.mxu0 0.0
    %1100 = vmatpush1.xpose.msra.mxu0 0.0
    %1101 = vmatprep.subr.mxu0 0.0
    %1102 = vmatpush1.xpose.msra.mxu0 0.0
    %1103 = vmatprep.subr.mxu0 0.0
    %1104 = vmatpush1.xpose.msra.mxu0 0.0
    %1105 = vmatprep.subr.mxu0 0.0
    %1106 = vmatpush1.xpose.msra.mxu0 0.0
    %1107 = vmatprep.subr.mxu0 0.0
    %1108 = vmatpush1.xpose.msra.mxu0 0.0
    %1109 = vmatprep.subr.mxu0 0.0
    %1110 = vmatpush1.xpose.msra.mxu0 0.0
    %1111 = vmatprep.subr.mxu0 0.0
    %1112 = vmatpush1.xpose.msra.mxu0 %v1085
    %1113 = vmatprep.subr.mxu0 0.0
    %1114 = vmatpush1.xpose.msra.mxu0 %v1083
    %1115 = vmatprep.subr.mxu0 0.0
    %1116 = vmatpush1.xpose.msra.mxu0 %v1081
    %1117 = vmatprep.subr.mxu0 0.0
    %1118 = vmatpush1.xpose.msra.mxu0 %v1079
    %1119 = vmatprep.subr.mxu0 0.0
    %1120 = vmatpush2.xpose.msra.mxu0 0.0
    %1121 = vmatprep.subr.mxu0 0.0
    %1122 = vmatpush2.xpose.msra.mxu0 0.0
    %1123 = vmatprep.subr.mxu0 0.0
    %1124 = vmatpush2.xpose.msra.mxu0 0.0
    %1125 = vmatprep.subr.mxu0 0.0
    %1126 = vmatpush2.xpose.msra.mxu0 0.0
    %1127 = vmatprep.subr.mxu0 0.0
    %1128 = vmatpush2.xpose.msra.mxu0 0.0
    %1129 = vmatprep.subr.mxu0 0.0
    %1130 = vmatpush2.xpose.msra.mxu0 0.0
    %1131 = vmatprep.subr.mxu0 0.0
    %1132 = vmatpush2.xpose.msra.mxu0 0.0
    %1133 = vmatprep.subr.mxu0 0.0
    %1134 = vmatpush2.xpose.msra.mxu0 0.0
    %1135 = vmatprep.subr.mxu0 0.0
    %1136 = vmatpush2.xpose.msra.mxu0 0.0
    %1137 = vmatprep.subr.mxu0 0.0
    %1138 = vmatpush2.xpose.msra.mxu0 0.0
    %1139 = vmatprep.subr.mxu0 0.0
    %1140 = vmatpush2.xpose.msra.mxu0 0.0
    %1141 = vmatprep.subr.mxu0 0.0
    %1142 = vmatpush2.xpose.msra.mxu0 0.0
    %1143 = vmatprep.subr.mxu0 0.0
    %1144 = vmatpush2.xpose.msra.mxu0 0.0
    %1145 = vmatprep.subr.mxu0 0.0
    %1146 = vmatpush2.xpose.msra.mxu0 0.0
    %1147 = vmatprep.subr.mxu0 0.0
    %1148 = vmatpush2.xpose.msra.mxu0 0.0
    %1149 = vmatprep.subr.mxu0 0.0
    %1150 = vmatpush2.xpose.msra.mxu0 0.0
    %1151 = vmatprep.mubr.f32.mxu0 0.0
    %1152 = vmatmul.mubr.f32.gmra.mxu0 %v1077
    %v1153 = vpop.f32.mrf.mxu0
    %v1154 = vadd.f32 %v1073, %v1153
    %v1155 = vpop.f32.mrf.mxu0
    %1156 = vdwg.mxu0
    %1157 = vrot.lane.b32.xlu0 %v708, 112
    %v1158 = vpop.permute.xlu0 %1157
    %1159 = vrot.lane.b32.xlu0 %v790, 112
    %v1160 = vpop.permute.xlu0 %1159
    %1161 = vrot.lane.b32.xlu0 %v757, 88
    %v1162 = vpop.permute.xlu0 %1161
    %v1163 = vsel %vm515, %v1158, 0
    %v1165 = vsel %vm515, %v1160, 0
    %v1167 = vsel %vm515, %v1162, 0
    %1169 = vmatprep.subr.mxu0 0.0
    %1170 = vmatpush1.xpose.msra.mxu0 0.0
    %1171 = vmatprep.subr.mxu0 0.0
    %1172 = vmatpush1.xpose.msra.mxu0 0.0
    %1173 = vmatprep.subr.mxu0 0.0
    %1174 = vmatpush1.xpose.msra.mxu0 0.0
    %1175 = vmatprep.subr.mxu0 0.0
    %1176 = vmatpush1.xpose.msra.mxu0 0.0
    %1177 = vmatprep.subr.mxu0 0.0
    %1178 = vmatpush1.xpose.msra.mxu0 0.0
    %1179 = vmatprep.subr.mxu0 0.0
    %1180 = vmatpush1.xpose.msra.mxu0 0.0
    %1181 = vmatprep.subr.mxu0 0.0
    %1182 = vmatpush1.xpose.msra.mxu0 0.0
    %1183 = vmatprep.subr.mxu0 0.0
    %1184 = vmatpush1.xpose.msra.mxu0 0.0
    %1185 = vmatprep.subr.mxu0 0.0
    %1186 = vmatpush1.xpose.msra.mxu0 0.0
    %1187 = vmatprep.subr.mxu0 0.0
    %1188 = vmatpush1.xpose.msra.mxu0 0.0
    %1189 = vmatprep.subr.mxu0 0.0
    %1190 = vmatpush1.xpose.msra.mxu0 0.0
    %1191 = vmatprep.subr.mxu0 0.0
    %1192 = vmatpush1.xpose.msra.mxu0 0.0
    %1193 = vmatprep.subr.mxu0 0.0
    %1194 = vmatpush1.xpose.msra.mxu0 0.0
    %1195 = vmatprep.subr.mxu0 0.0
    %1196 = vmatpush1.xpose.msra.mxu0 0.0
    %1197 = vmatprep.subr.mxu0 0.0
    %1198 = vmatpush1.xpose.msra.mxu0 0.0
    %1199 = vmatprep.subr.mxu0 0.0
    %1200 = vmatpush1.xpose.msra.mxu0 %v1167
    %1201 = vmatprep.subr.mxu0 0.0
    %1202 = vmatpush2.xpose.msra.mxu0 0.0
    %1203 = vmatprep.subr.mxu0 0.0
    %1204 = vmatpush2.xpose.msra.mxu0 0.0
    %1205 = vmatprep.subr.mxu0 0.0
    %1206 = vmatpush2.xpose.msra.mxu0 0.0
    %1207 = vmatprep.subr.mxu0 0.0
    %1208 = vmatpush2.xpose.msra.mxu0 0.0
    %1209 = vmatprep.subr.mxu0 0.0
    %1210 = vmatpush2.xpose.msra.mxu0 0.0
    %1211 = vmatprep.subr.mxu0 0.0
    %1212 = vmatpush2.xpose.msra.mxu0 0.0
    %1213 = vmatprep.subr.mxu0 0.0
    %1214 = vmatpush2.xpose.msra.mxu0 0.0
    %1215 = vmatprep.subr.mxu0 0.0
    %1216 = vmatpush2.xpose.msra.mxu0 0.0
    %1217 = vmatprep.subr.mxu0 0.0
    %1218 = vmatpush2.xpose.msra.mxu0 0.0
    %1219 = vmatprep.subr.mxu0 0.0
    %1220 = vmatpush2.xpose.msra.mxu0 0.0
    %1221 = vmatprep.subr.mxu0 0.0
    %1222 = vmatpush2.xpose.msra.mxu0 0.0
    %1223 = vmatprep.subr.mxu0 0.0
    %1224 = vmatpush2.xpose.msra.mxu0 0.0
    %1225 = vmatprep.subr.mxu0 0.0
    %1226 = vmatpush2.xpose.msra.mxu0 0.0
    %1227 = vmatprep.subr.mxu0 0.0
    %1228 = vmatpush2.xpose.msra.mxu0 0.0
    %1229 = vmatprep.subr.mxu0 0.0
    %1230 = vmatpush2.xpose.msra.mxu0 0.0
    %1231 = vmatprep.subr.mxu0 0.0
    %1232 = vmatpush2.xpose.msra.mxu0 0.0
    %1233 = vmatprep.mubr.f32.mxu0 0.0
    %1234 = vmatmul.mubr.f32.gmra.mxu0 %v1163
    %v1235 = vpop.f32.mrf.mxu0
    %v1236 = vadd.f32 0.0, %v1235
    %v1237 = vpop.f32.mrf.mxu0
    %1238 = vmatprep.mubr.f32.mxu0 0.0
    %1239 = vmatmul.mubr.f32.gmra.mxu0 %v1165
    %v1240 = vpop.f32.mrf.mxu0
    %v1241 = vadd.f32 0.0, %v1240
    %v1242 = vpop.f32.mrf.mxu0
    %1243 = vdwg.mxu0
    %v1244 = vsel %vm786, %v1236, -1e+30
    %v1245 = vsel %vm787, %v1241, -1e+30
    %v1246 = vsel %vm515, %v1244, -inf
    %1247 = vmax.xlane.f32.xlu0 %v1246
    %v1248 = vpop.xlane.xlu0 %1247
    %v1249 = vsel %vm515, %v1245, -inf
    %1250 = vmax.xlane.f32.xlu0 %v1249
    %v1251 = vpop.xlane.xlu0 %1250
    %v1252 = vsub.f32 %v1244, %v1248
    %v1253 = vsub.f32 %v1245, %v1251
    %v1254 = vmul.f32 %v1252, 1.442695
    %v1255 = vpow.pop %v1254
    %v1256 = vmul.f32 %v1253, 1.442695
    %v1257 = vpow.pop %v1256
    %v1258 = vsel %vm515, %v1255, 0.0
    %1259 = vadd.xlane.f32.xlu0 %v1258
    %v1260 = vpop.xlane.xlu0 %1259
    %v1261 = vsel %vm515, %v1257, 0.0
    %1262 = vadd.xlane.f32.xlu0 %v1261
    %v1263 = vpop.xlane.xlu0 %1262
    %v1264 = vrcp.pop %v1260
    %v1265 = vmul.f32 %v1255, %v1264
    %v1266 = vrcp.pop %v1263
    %v1267 = vmul.f32 %v1257, %v1266
    %1268 = vrot.lane.b32.xlu0 %v648, 72
    %v1269 = vpop.permute.xlu0 %1268
    %v1272 = vsel %vm515, %v1265, 0
    %v1275 = vsel %vm515, %v1267, 0
    %1277 = vmatprep.subr.mxu0 0.0
    %1278 = vmatpush1.msra.mxu0 0.0
    %1279 = vmatprep.subr.mxu0 0.0
    %1280 = vmatpush1.msra.mxu0 0.0
    %1281 = vmatprep.subr.mxu0 0.0
    %1282 = vmatpush1.msra.mxu0 0.0
    %1283 = vmatprep.subr.mxu0 0.0
    %1284 = vmatpush1.msra.mxu0 0.0
    %1285 = vmatprep.subr.mxu0 0.0
    %1286 = vmatpush1.msra.mxu0 0.0
    %1287 = vmatprep.subr.mxu0 0.0
    %1288 = vmatpush1.msra.mxu0 0.0
    %1289 = vmatprep.subr.mxu0 0.0
    %1290 = vmatpush1.msra.mxu0 0.0
    %1291 = vmatprep.subr.mxu0 0.0
    %1292 = vmatpush1.msra.mxu0 0.0
    %1293 = vmatprep.subr.mxu0 0.0
    %1294 = vmatpush1.msra.mxu0 0.0
    %1295 = vmatprep.subr.mxu0 0.0
    %1296 = vmatpush1.msra.mxu0 0.0
    %1297 = vmatprep.subr.mxu0 0.0
    %1298 = vmatpush1.msra.mxu0 0.0
    %1299 = vmatprep.subr.mxu0 0.0
    %1300 = vmatpush1.msra.mxu0 0.0
    %1301 = vmatprep.subr.mxu0 0.0
    %1302 = vmatpush1.msra.mxu0 0.0
    %1303 = vmatprep.subr.mxu0 0.0
    %1304 = vmatpush1.msra.mxu0 0.0
    %1305 = vmatprep.subr.mxu0 0.0
    %1306 = vmatpush1.msra.mxu0 0.0
    %1307 = vmatprep.subr.mxu0 0.0
    %1308 = vmatpush1.msra.mxu0 %v1269
    %1309 = vmatprep.subr.mxu0 0.0
    %1310 = vmatpush2.msra.mxu0 0.0
    %1311 = vmatprep.subr.mxu0 0.0
    %1312 = vmatpush2.msra.mxu0 0.0
    %1313 = vmatprep.subr.mxu0 0.0
    %1314 = vmatpush2.msra.mxu0 0.0
    %1315 = vmatprep.subr.mxu0 0.0
    %1316 = vmatpush2.msra.mxu0 0.0
    %1317 = vmatprep.subr.mxu0 0.0
    %1318 = vmatpush2.msra.mxu0 0.0
    %1319 = vmatprep.subr.mxu0 0.0
    %1320 = vmatpush2.msra.mxu0 0.0
    %1321 = vmatprep.subr.mxu0 0.0
    %1322 = vmatpush2.msra.mxu0 0.0
    %1323 = vmatprep.subr.mxu0 0.0
    %1324 = vmatpush2.msra.mxu0 0.0
    %1325 = vmatprep.subr.mxu0 0.0
    %1326 = vmatpush2.msra.mxu0 0.0
    %1327 = vmatprep.subr.mxu0 0.0
    %1328 = vmatpush2.msra.mxu0 0.0
    %1329 = vmatprep.subr.mxu0 0.0
    %1330 = vmatpush2.msra.mxu0 0.0
    %1331 = vmatprep.subr.mxu0 0.0
    %1332 = vmatpush2.msra.mxu0 0.0
    %1333 = vmatprep.subr.mxu0 0.0
    %1334 = vmatpush2.msra.mxu0 0.0
    %1335 = vmatprep.subr.mxu0 0.0
    %1336 = vmatpush2.msra.mxu0 0.0
    %1337 = vmatprep.subr.mxu0 0.0
    %1338 = vmatpush2.msra.mxu0 0.0
    %1339 = vmatprep.subr.mxu0 0.0
    %1340 = vmatpush2.msra.mxu0 0.0
    %1341 = vmatprep.mubr.f32.mxu0 0.0
    %1342 = vmatmul.mubr.f32.gmra.mxu0 %v1272
    %v1343 = vpop.f32.mrf.mxu0
    %v1344 = vadd.f32 0.0, %v1343
    %v1345 = vpop.f32.mrf.mxu0
    %1346 = vmatprep.mubr.f32.mxu0 0.0
    %1347 = vmatmul.mubr.f32.gmra.mxu0 %v1275
    %v1348 = vpop.f32.mrf.mxu0
    %v1349 = vadd.f32 0.0, %v1348
    %v1350 = vpop.f32.mrf.mxu0
    %1351 = vdwg.mxu0
    %1352 = vrot.lane.b32.xlu0 %v34, 112
    %v1353 = vpop.permute.xlu0 %1352
    %1354 = vrot.lane.b32.xlu0 %v35, 112
    %v1355 = vpop.permute.xlu0 %1354
    %1356 = vrot.lane.b32.xlu0 %v36, 112
    %v1357 = vpop.permute.xlu0 %1356
    %1358 = vrot.lane.b32.xlu0 %v37, 112
    %v1359 = vpop.permute.xlu0 %1358
    %v1361 = vsel %vm515, %v1344, 0
    %v1363 = vsel %vm515, %v1353, 0
    %v1365 = vsel %vm515, %v1355, 0
    %v1367 = vsel %vm515, %v1357, 0
    %v1369 = vsel %vm515, %v1359, 0
    %1371 = vmatprep.subr.mxu0 0.0
    %1372 = vmatpush1.xpose.msra.mxu0 0.0
    %1373 = vmatprep.subr.mxu0 0.0
    %1374 = vmatpush1.xpose.msra.mxu0 0.0
    %1375 = vmatprep.subr.mxu0 0.0
    %1376 = vmatpush1.xpose.msra.mxu0 0.0
    %1377 = vmatprep.subr.mxu0 0.0
    %1378 = vmatpush1.xpose.msra.mxu0 0.0
    %1379 = vmatprep.subr.mxu0 0.0
    %1380 = vmatpush1.xpose.msra.mxu0 0.0
    %1381 = vmatprep.subr.mxu0 0.0
    %1382 = vmatpush1.xpose.msra.mxu0 0.0
    %1383 = vmatprep.subr.mxu0 0.0
    %1384 = vmatpush1.xpose.msra.mxu0 0.0
    %1385 = vmatprep.subr.mxu0 0.0
    %1386 = vmatpush1.xpose.msra.mxu0 0.0
    %1387 = vmatprep.subr.mxu0 0.0
    %1388 = vmatpush1.xpose.msra.mxu0 0.0
    %1389 = vmatprep.subr.mxu0 0.0
    %1390 = vmatpush1.xpose.msra.mxu0 0.0
    %1391 = vmatprep.subr.mxu0 0.0
    %1392 = vmatpush1.xpose.msra.mxu0 0.0
    %1393 = vmatprep.subr.mxu0 0.0
    %1394 = vmatpush1.xpose.msra.mxu0 0.0
    %1395 = vmatprep.subr.mxu0 0.0
    %1396 = vmatpush1.xpose.msra.mxu0 %v1369
    %1397 = vmatprep.subr.mxu0 0.0
    %1398 = vmatpush1.xpose.msra.mxu0 %v1367
    %1399 = vmatprep.subr.mxu0 0.0
    %1400 = vmatpush1.xpose.msra.mxu0 %v1365
    %1401 = vmatprep.subr.mxu0 0.0
    %1402 = vmatpush1.xpose.msra.mxu0 %v1363
    %1403 = vmatprep.subr.mxu0 0.0
    %1404 = vmatpush2.xpose.msra.mxu0 0.0
    %1405 = vmatprep.subr.mxu0 0.0
    %1406 = vmatpush2.xpose.msra.mxu0 0.0
    %1407 = vmatprep.subr.mxu0 0.0
    %1408 = vmatpush2.xpose.msra.mxu0 0.0
    %1409 = vmatprep.subr.mxu0 0.0
    %1410 = vmatpush2.xpose.msra.mxu0 0.0
    %1411 = vmatprep.subr.mxu0 0.0
    %1412 = vmatpush2.xpose.msra.mxu0 0.0
    %1413 = vmatprep.subr.mxu0 0.0
    %1414 = vmatpush2.xpose.msra.mxu0 0.0
    %1415 = vmatprep.subr.mxu0 0.0
    %1416 = vmatpush2.xpose.msra.mxu0 0.0
    %1417 = vmatprep.subr.mxu0 0.0
    %1418 = vmatpush2.xpose.msra.mxu0 0.0
    %1419 = vmatprep.subr.mxu0 0.0
    %1420 = vmatpush2.xpose.msra.mxu0 0.0
    %1421 = vmatprep.subr.mxu0 0.0
    %1422 = vmatpush2.xpose.msra.mxu0 0.0
    %1423 = vmatprep.subr.mxu0 0.0
    %1424 = vmatpush2.xpose.msra.mxu0 0.0
    %1425 = vmatprep.subr.mxu0 0.0
    %1426 = vmatpush2.xpose.msra.mxu0 0.0
    %1427 = vmatprep.subr.mxu0 0.0
    %1428 = vmatpush2.xpose.msra.mxu0 0.0
    %1429 = vmatprep.subr.mxu0 0.0
    %1430 = vmatpush2.xpose.msra.mxu0 0.0
    %1431 = vmatprep.subr.mxu0 0.0
    %1432 = vmatpush2.xpose.msra.mxu0 0.0
    %1433 = vmatprep.subr.mxu0 0.0
    %1434 = vmatpush2.xpose.msra.mxu0 0.0
    %1435 = vmatprep.mubr.f32.mxu0 0.0
    %1436 = vmatmul.mubr.f32.gmra.mxu0 %v1361
    %v1437 = vpop.f32.mrf.mxu0
    %v1438 = vadd.f32 0.0, %v1437
    %v1439 = vpop.f32.mrf.mxu0
    %1440 = vdwg.mxu0
    %v1441 = vadd.f32 %v1154, %v1438
    %1442 = vrot.lane.b32.xlu0 %v34, 104
    %v1443 = vpop.permute.xlu0 %1442
    %1444 = vrot.lane.b32.xlu0 %v35, 104
    %v1445 = vpop.permute.xlu0 %1444
    %1446 = vrot.lane.b32.xlu0 %v36, 104
    %v1447 = vpop.permute.xlu0 %1446
    %1448 = vrot.lane.b32.xlu0 %v37, 104
    %v1449 = vpop.permute.xlu0 %1448
    %v1451 = vsel %vm515, %v1349, 0
    %v1453 = vsel %vm515, %v1443, 0
    %v1455 = vsel %vm515, %v1445, 0
    %v1457 = vsel %vm515, %v1447, 0
    %v1459 = vsel %vm515, %v1449, 0
    %1461 = vmatprep.subr.mxu0 0.0
    %1462 = vmatpush1.xpose.msra.mxu0 0.0
    %1463 = vmatprep.subr.mxu0 0.0
    %1464 = vmatpush1.xpose.msra.mxu0 0.0
    %1465 = vmatprep.subr.mxu0 0.0
    %1466 = vmatpush1.xpose.msra.mxu0 0.0
    %1467 = vmatprep.subr.mxu0 0.0
    %1468 = vmatpush1.xpose.msra.mxu0 0.0
    %1469 = vmatprep.subr.mxu0 0.0
    %1470 = vmatpush1.xpose.msra.mxu0 0.0
    %1471 = vmatprep.subr.mxu0 0.0
    %1472 = vmatpush1.xpose.msra.mxu0 0.0
    %1473 = vmatprep.subr.mxu0 0.0
    %1474 = vmatpush1.xpose.msra.mxu0 0.0
    %1475 = vmatprep.subr.mxu0 0.0
    %1476 = vmatpush1.xpose.msra.mxu0 0.0
    %1477 = vmatprep.subr.mxu0 0.0
    %1478 = vmatpush1.xpose.msra.mxu0 0.0
    %1479 = vmatprep.subr.mxu0 0.0
    %1480 = vmatpush1.xpose.msra.mxu0 0.0
    %1481 = vmatprep.subr.mxu0 0.0
    %1482 = vmatpush1.xpose.msra.mxu0 0.0
    %1483 = vmatprep.subr.mxu0 0.0
    %1484 = vmatpush1.xpose.msra.mxu0 0.0
    %1485 = vmatprep.subr.mxu0 0.0
    %1486 = vmatpush1.xpose.msra.mxu0 %v1459
    %1487 = vmatprep.subr.mxu0 0.0
    %1488 = vmatpush1.xpose.msra.mxu0 %v1457
    %1489 = vmatprep.subr.mxu0 0.0
    %1490 = vmatpush1.xpose.msra.mxu0 %v1455
    %1491 = vmatprep.subr.mxu0 0.0
    %1492 = vmatpush1.xpose.msra.mxu0 %v1453
    %1493 = vmatprep.subr.mxu0 0.0
    %1494 = vmatpush2.xpose.msra.mxu0 0.0
    %1495 = vmatprep.subr.mxu0 0.0
    %1496 = vmatpush2.xpose.msra.mxu0 0.0
    %1497 = vmatprep.subr.mxu0 0.0
    %1498 = vmatpush2.xpose.msra.mxu0 0.0
    %1499 = vmatprep.subr.mxu0 0.0
    %1500 = vmatpush2.xpose.msra.mxu0 0.0
    %1501 = vmatprep.subr.mxu0 0.0
    %1502 = vmatpush2.xpose.msra.mxu0 0.0
    %1503 = vmatprep.subr.mxu0 0.0
    %1504 = vmatpush2.xpose.msra.mxu0 0.0
    %1505 = vmatprep.subr.mxu0 0.0
    %1506 = vmatpush2.xpose.msra.mxu0 0.0
    %1507 = vmatprep.subr.mxu0 0.0
    %1508 = vmatpush2.xpose.msra.mxu0 0.0
    %1509 = vmatprep.subr.mxu0 0.0
    %1510 = vmatpush2.xpose.msra.mxu0 0.0
    %1511 = vmatprep.subr.mxu0 0.0
    %1512 = vmatpush2.xpose.msra.mxu0 0.0
    %1513 = vmatprep.subr.mxu0 0.0
    %1514 = vmatpush2.xpose.msra.mxu0 0.0
    %1515 = vmatprep.subr.mxu0 0.0
    %1516 = vmatpush2.xpose.msra.mxu0 0.0
    %1517 = vmatprep.subr.mxu0 0.0
    %1518 = vmatpush2.xpose.msra.mxu0 0.0
    %1519 = vmatprep.subr.mxu0 0.0
    %1520 = vmatpush2.xpose.msra.mxu0 0.0
    %1521 = vmatprep.subr.mxu0 0.0
    %1522 = vmatpush2.xpose.msra.mxu0 0.0
    %1523 = vmatprep.subr.mxu0 0.0
    %1524 = vmatpush2.xpose.msra.mxu0 0.0
    %1525 = vmatprep.mubr.f32.mxu0 0.0
    %1526 = vmatmul.mubr.f32.gmra.mxu0 %v1451
    %v1527 = vpop.f32.mrf.mxu0
    %v1528 = vadd.f32 0.0, %v1527
    %v1529 = vpop.f32.mrf.mxu0
    %1530 = vdwg.mxu0
    %v1531 = vadd.f32 %v1441, %v1528
    %1533 = vrot.lane.b32.xlu0 %v709, 120
    %v1534 = vpop.permute.xlu0 %1533
    %1536 = vrot.lane.b32.xlu0 %v758, 96
    %v1537 = vpop.permute.xlu0 %1536
    %v1538 = vsel %vm515, %v709, 0
    %v1540 = vsel %vm515, %v1534, 0
    %v1542 = vsel %vm515, %v1537, 0
    %1544 = vmatprep.subr.mxu0 0.0
    %1545 = vmatpush1.xpose.msra.mxu0 0.0
    %1546 = vmatprep.subr.mxu0 0.0
    %1547 = vmatpush1.xpose.msra.mxu0 0.0
    %1548 = vmatprep.subr.mxu0 0.0
    %1549 = vmatpush1.xpose.msra.mxu0 0.0
    %1550 = vmatprep.subr.mxu0 0.0
    %1551 = vmatpush1.xpose.msra.mxu0 0.0
    %1552 = vmatprep.subr.mxu0 0.0
    %1553 = vmatpush1.xpose.msra.mxu0 0.0
    %1554 = vmatprep.subr.mxu0 0.0
    %1555 = vmatpush1.xpose.msra.mxu0 0.0
    %1556 = vmatprep.subr.mxu0 0.0
    %1557 = vmatpush1.xpose.msra.mxu0 0.0
    %1558 = vmatprep.subr.mxu0 0.0
    %1559 = vmatpush1.xpose.msra.mxu0 0.0
    %1560 = vmatprep.subr.mxu0 0.0
    %1561 = vmatpush1.xpose.msra.mxu0 0.0
    %1562 = vmatprep.subr.mxu0 0.0
    %1563 = vmatpush1.xpose.msra.mxu0 0.0
    %1564 = vmatprep.subr.mxu0 0.0
    %1565 = vmatpush1.xpose.msra.mxu0 0.0
    %1566 = vmatprep.subr.mxu0 0.0
    %1567 = vmatpush1.xpose.msra.mxu0 0.0
    %1568 = vmatprep.subr.mxu0 0.0
    %1569 = vmatpush1.xpose.msra.mxu0 0.0
    %1570 = vmatprep.subr.mxu0 0.0
    %1571 = vmatpush1.xpose.msra.mxu0 0.0
    %1572 = vmatprep.subr.mxu0 0.0
    %1573 = vmatpush1.xpose.msra.mxu0 0.0
    %1574 = vmatprep.subr.mxu0 0.0
    %1575 = vmatpush1.xpose.msra.mxu0 %v1542
    %1576 = vmatprep.subr.mxu0 0.0
    %1577 = vmatpush2.xpose.msra.mxu0 0.0
    %1578 = vmatprep.subr.mxu0 0.0
    %1579 = vmatpush2.xpose.msra.mxu0 0.0
    %1580 = vmatprep.subr.mxu0 0.0
    %1581 = vmatpush2.xpose.msra.mxu0 0.0
    %1582 = vmatprep.subr.mxu0 0.0
    %1583 = vmatpush2.xpose.msra.mxu0 0.0
    %1584 = vmatprep.subr.mxu0 0.0
    %1585 = vmatpush2.xpose.msra.mxu0 0.0
    %1586 = vmatprep.subr.mxu0 0.0
    %1587 = vmatpush2.xpose.msra.mxu0 0.0
    %1588 = vmatprep.subr.mxu0 0.0
    %1589 = vmatpush2.xpose.msra.mxu0 0.0
    %1590 = vmatprep.subr.mxu0 0.0
    %1591 = vmatpush2.xpose.msra.mxu0 0.0
    %1592 = vmatprep.subr.mxu0 0.0
    %1593 = vmatpush2.xpose.msra.mxu0 0.0
    %1594 = vmatprep.subr.mxu0 0.0
    %1595 = vmatpush2.xpose.msra.mxu0 0.0
    %1596 = vmatprep.subr.mxu0 0.0
    %1597 = vmatpush2.xpose.msra.mxu0 0.0
    %1598 = vmatprep.subr.mxu0 0.0
    %1599 = vmatpush2.xpose.msra.mxu0 0.0
    %1600 = vmatprep.subr.mxu0 0.0
    %1601 = vmatpush2.xpose.msra.mxu0 0.0
    %1602 = vmatprep.subr.mxu0 0.0
    %1603 = vmatpush2.xpose.msra.mxu0 0.0
    %1604 = vmatprep.subr.mxu0 0.0
    %1605 = vmatpush2.xpose.msra.mxu0 0.0
    %1606 = vmatprep.subr.mxu0 0.0
    %1607 = vmatpush2.xpose.msra.mxu0 0.0
    %1608 = vmatprep.mubr.f32.mxu0 0.0
    %1609 = vmatmul.mubr.f32.gmra.mxu0 %v1538
    %v1610 = vpop.f32.mrf.mxu0
    %v1611 = vadd.f32 0.0, %v1610
    %v1612 = vpop.f32.mrf.mxu0
    %1613 = vmatprep.mubr.f32.mxu0 0.0
    %1614 = vmatmul.mubr.f32.gmra.mxu0 %v1540
    %v1615 = vpop.f32.mrf.mxu0
    %v1616 = vadd.f32 0.0, %v1615
    %v1617 = vpop.f32.mrf.mxu0
    %1618 = vdwg.mxu0
    %v1619 = vsel %vm786, %v1611, -1e+30
    %v1620 = vsel %vm787, %v1616, -1e+30
    %v1621 = vsel %vm515, %v1619, -inf
    %1622 = vmax.xlane.f32.xlu0 %v1621
    %v1623 = vpop.xlane.xlu0 %1622
    %v1624 = vsel %vm515, %v1620, -inf
    %1625 = vmax.xlane.f32.xlu0 %v1624
    %v1626 = vpop.xlane.xlu0 %1625
    %v1627 = vsub.f32 %v1619, %v1623
    %v1628 = vsub.f32 %v1620, %v1626
    %v1629 = vmul.f32 %v1627, 1.442695
    %v1630 = vpow.pop %v1629
    %v1631 = vmul.f32 %v1628, 1.442695
    %v1632 = vpow.pop %v1631
    %v1633 = vsel %vm515, %v1630, 0.0
    %1634 = vadd.xlane.f32.xlu0 %v1633
    %v1635 = vpop.xlane.xlu0 %1634
    %v1636 = vsel %vm515, %v1632, 0.0
    %1637 = vadd.xlane.f32.xlu0 %v1636
    %v1638 = vpop.xlane.xlu0 %1637
    %v1639 = vrcp.pop %v1635
    %v1640 = vmul.f32 %v1630, %v1639
    %v1641 = vrcp.pop %v1638
    %v1642 = vmul.f32 %v1632, %v1641
    %1643 = vrot.lane.b32.xlu0 %v653, 80
    %v1644 = vpop.permute.xlu0 %1643
    %v1647 = vsel %vm515, %v1640, 0
    %v1650 = vsel %vm515, %v1642, 0
    %1652 = vmatprep.subr.mxu0 0.0
    %1653 = vmatpush1.msra.mxu0 0.0
    %1654 = vmatprep.subr.mxu0 0.0
    %1655 = vmatpush1.msra.mxu0 0.0
    %1656 = vmatprep.subr.mxu0 0.0
    %1657 = vmatpush1.msra.mxu0 0.0
    %1658 = vmatprep.subr.mxu0 0.0
    %1659 = vmatpush1.msra.mxu0 0.0
    %1660 = vmatprep.subr.mxu0 0.0
    %1661 = vmatpush1.msra.mxu0 0.0
    %1662 = vmatprep.subr.mxu0 0.0
    %1663 = vmatpush1.msra.mxu0 0.0
    %1664 = vmatprep.subr.mxu0 0.0
    %1665 = vmatpush1.msra.mxu0 0.0
    %1666 = vmatprep.subr.mxu0 0.0
    %1667 = vmatpush1.msra.mxu0 0.0
    %1668 = vmatprep.subr.mxu0 0.0
    %1669 = vmatpush1.msra.mxu0 0.0
    %1670 = vmatprep.subr.mxu0 0.0
    %1671 = vmatpush1.msra.mxu0 0.0
    %1672 = vmatprep.subr.mxu0 0.0
    %1673 = vmatpush1.msra.mxu0 0.0
    %1674 = vmatprep.subr.mxu0 0.0
    %1675 = vmatpush1.msra.mxu0 0.0
    %1676 = vmatprep.subr.mxu0 0.0
    %1677 = vmatpush1.msra.mxu0 0.0
    %1678 = vmatprep.subr.mxu0 0.0
    %1679 = vmatpush1.msra.mxu0 0.0
    %1680 = vmatprep.subr.mxu0 0.0
    %1681 = vmatpush1.msra.mxu0 0.0
    %1682 = vmatprep.subr.mxu0 0.0
    %1683 = vmatpush1.msra.mxu0 %v1644
    %1684 = vmatprep.subr.mxu0 0.0
    %1685 = vmatpush2.msra.mxu0 0.0
    %1686 = vmatprep.subr.mxu0 0.0
    %1687 = vmatpush2.msra.mxu0 0.0
    %1688 = vmatprep.subr.mxu0 0.0
    %1689 = vmatpush2.msra.mxu0 0.0
    %1690 = vmatprep.subr.mxu0 0.0
    %1691 = vmatpush2.msra.mxu0 0.0
    %1692 = vmatprep.subr.mxu0 0.0
    %1693 = vmatpush2.msra.mxu0 0.0
    %1694 = vmatprep.subr.mxu0 0.0
    %1695 = vmatpush2.msra.mxu0 0.0
    %1696 = vmatprep.subr.mxu0 0.0
    %1697 = vmatpush2.msra.mxu0 0.0
    %1698 = vmatprep.subr.mxu0 0.0
    %1699 = vmatpush2.msra.mxu0 0.0
    %1700 = vmatprep.subr.mxu0 0.0
    %1701 = vmatpush2.msra.mxu0 0.0
    %1702 = vmatprep.subr.mxu0 0.0
    %1703 = vmatpush2.msra.mxu0 0.0
    %1704 = vmatprep.subr.mxu0 0.0
    %1705 = vmatpush2.msra.mxu0 0.0
    %1706 = vmatprep.subr.mxu0 0.0
    %1707 = vmatpush2.msra.mxu0 0.0
    %1708 = vmatprep.subr.mxu0 0.0
    %1709 = vmatpush2.msra.mxu0 0.0
    %1710 = vmatprep.subr.mxu0 0.0
    %1711 = vmatpush2.msra.mxu0 0.0
    %1712 = vmatprep.subr.mxu0 0.0
    %1713 = vmatpush2.msra.mxu0 0.0
    %1714 = vmatprep.subr.mxu0 0.0
    %1715 = vmatpush2.msra.mxu0 0.0
    %1716 = vmatprep.mubr.f32.mxu0 0.0
    %1717 = vmatmul.mubr.f32.gmra.mxu0 %v1647
    %v1718 = vpop.f32.mrf.mxu0
    %v1719 = vadd.f32 0.0, %v1718
    %v1720 = vpop.f32.mrf.mxu0
    %1721 = vmatprep.mubr.f32.mxu0 0.0
    %1722 = vmatmul.mubr.f32.gmra.mxu0 %v1650
    %v1723 = vpop.f32.mrf.mxu0
    %v1724 = vadd.f32 0.0, %v1723
    %v1725 = vpop.f32.mrf.mxu0
    %1726 = vdwg.mxu0
    %v1728 = vsel %vm515, %v1724, 0
    %1730 = vmatprep.subr.mxu0 0.0
    %1731 = vmatpush1.xpose.msra.mxu0 0.0
    %1732 = vmatprep.subr.mxu0 0.0
    %1733 = vmatpush1.xpose.msra.mxu0 0.0
    %1734 = vmatprep.subr.mxu0 0.0
    %1735 = vmatpush1.xpose.msra.mxu0 0.0
    %1736 = vmatprep.subr.mxu0 0.0
    %1737 = vmatpush1.xpose.msra.mxu0 0.0
    %1738 = vmatprep.subr.mxu0 0.0
    %1739 = vmatpush1.xpose.msra.mxu0 0.0
    %1740 = vmatprep.subr.mxu0 0.0
    %1741 = vmatpush1.xpose.msra.mxu0 0.0
    %1742 = vmatprep.subr.mxu0 0.0
    %1743 = vmatpush1.xpose.msra.mxu0 0.0
    %1744 = vmatprep.subr.mxu0 0.0
    %1745 = vmatpush1.xpose.msra.mxu0 0.0
    %1746 = vmatprep.subr.mxu0 0.0
    %1747 = vmatpush1.xpose.msra.mxu0 0.0
    %1748 = vmatprep.subr.mxu0 0.0
    %1749 = vmatpush1.xpose.msra.mxu0 0.0
    %1750 = vmatprep.subr.mxu0 0.0
    %1751 = vmatpush1.xpose.msra.mxu0 0.0
    %1752 = vmatprep.subr.mxu0 0.0
    %1753 = vmatpush1.xpose.msra.mxu0 0.0
    %1754 = vmatprep.subr.mxu0 0.0
    %1755 = vmatpush1.xpose.msra.mxu0 %v1004
    %1756 = vmatprep.subr.mxu0 0.0
    %1757 = vmatpush1.xpose.msra.mxu0 %v1002
    %1758 = vmatprep.subr.mxu0 0.0
    %1759 = vmatpush1.xpose.msra.mxu0 %v1000
    %1760 = vmatprep.subr.mxu0 0.0
    %1761 = vmatpush1.xpose.msra.mxu0 %v998
    %1762 = vmatprep.subr.mxu0 0.0
    %1763 = vmatpush2.xpose.msra.mxu0 0.0
    %1764 = vmatprep.subr.mxu0 0.0
    %1765 = vmatpush2.xpose.msra.mxu0 0.0
    %1766 = vmatprep.subr.mxu0 0.0
    %1767 = vmatpush2.xpose.msra.mxu0 0.0
    %1768 = vmatprep.subr.mxu0 0.0
    %1769 = vmatpush2.xpose.msra.mxu0 0.0
    %1770 = vmatprep.subr.mxu0 0.0
    %1771 = vmatpush2.xpose.msra.mxu0 0.0
    %1772 = vmatprep.subr.mxu0 0.0
    %1773 = vmatpush2.xpose.msra.mxu0 0.0
    %1774 = vmatprep.subr.mxu0 0.0
    %1775 = vmatpush2.xpose.msra.mxu0 0.0
    %1776 = vmatprep.subr.mxu0 0.0
    %1777 = vmatpush2.xpose.msra.mxu0 0.0
    %1778 = vmatprep.subr.mxu0 0.0
    %1779 = vmatpush2.xpose.msra.mxu0 0.0
    %1780 = vmatprep.subr.mxu0 0.0
    %1781 = vmatpush2.xpose.msra.mxu0 0.0
    %1782 = vmatprep.subr.mxu0 0.0
    %1783 = vmatpush2.xpose.msra.mxu0 0.0
    %1784 = vmatprep.subr.mxu0 0.0
    %1785 = vmatpush2.xpose.msra.mxu0 0.0
    %1786 = vmatprep.subr.mxu0 0.0
    %1787 = vmatpush2.xpose.msra.mxu0 0.0
    %1788 = vmatprep.subr.mxu0 0.0
    %1789 = vmatpush2.xpose.msra.mxu0 0.0
    %1790 = vmatprep.subr.mxu0 0.0
    %1791 = vmatpush2.xpose.msra.mxu0 0.0
    %1792 = vmatprep.subr.mxu0 0.0
    %1793 = vmatpush2.xpose.msra.mxu0 0.0
    %1794 = vmatprep.mubr.f32.mxu0 0.0
    %1795 = vmatmul.mubr.f32.gmra.mxu0 %v1728
    %v1796 = vpop.f32.mrf.mxu0
    %v1797 = vadd.f32 0.0, %v1796
    %v1798 = vpop.f32.mrf.mxu0
    %1799 = vdwg.mxu0
    %v1801 = vsel %vm515, %v1719, 0
    %1803 = vmatprep.subr.mxu0 0.0
    %1804 = vmatpush1.xpose.msra.mxu0 0.0
    %1805 = vmatprep.subr.mxu0 0.0
    %1806 = vmatpush1.xpose.msra.mxu0 0.0
    %1807 = vmatprep.subr.mxu0 0.0
    %1808 = vmatpush1.xpose.msra.mxu0 0.0
    %1809 = vmatprep.subr.mxu0 0.0
    %1810 = vmatpush1.xpose.msra.mxu0 0.0
    %1811 = vmatprep.subr.mxu0 0.0
    %1812 = vmatpush1.xpose.msra.mxu0 0.0
    %1813 = vmatprep.subr.mxu0 0.0
    %1814 = vmatpush1.xpose.msra.mxu0 0.0
    %1815 = vmatprep.subr.mxu0 0.0
    %1816 = vmatpush1.xpose.msra.mxu0 0.0
    %1817 = vmatprep.subr.mxu0 0.0
    %1818 = vmatpush1.xpose.msra.mxu0 0.0
    %1819 = vmatprep.subr.mxu0 0.0
    %1820 = vmatpush1.xpose.msra.mxu0 0.0
    %1821 = vmatprep.subr.mxu0 0.0
    %1822 = vmatpush1.xpose.msra.mxu0 0.0
    %1823 = vmatprep.subr.mxu0 0.0
    %1824 = vmatpush1.xpose.msra.mxu0 0.0
    %1825 = vmatprep.subr.mxu0 0.0
    %1826 = vmatpush1.xpose.msra.mxu0 0.0
    %1827 = vmatprep.subr.mxu0 0.0
    %1828 = vmatpush1.xpose.msra.mxu0 %v1085
    %1829 = vmatprep.subr.mxu0 0.0
    %1830 = vmatpush1.xpose.msra.mxu0 %v1083
    %1831 = vmatprep.subr.mxu0 0.0
    %1832 = vmatpush1.xpose.msra.mxu0 %v1081
    %1833 = vmatprep.subr.mxu0 0.0
    %1834 = vmatpush1.xpose.msra.mxu0 %v1079
    %1835 = vmatprep.subr.mxu0 0.0
    %1836 = vmatpush2.xpose.msra.mxu0 0.0
    %1837 = vmatprep.subr.mxu0 0.0
    %1838 = vmatpush2.xpose.msra.mxu0 0.0
    %1839 = vmatprep.subr.mxu0 0.0
    %1840 = vmatpush2.xpose.msra.mxu0 0.0
    %1841 = vmatprep.subr.mxu0 0.0
    %1842 = vmatpush2.xpose.msra.mxu0 0.0
    %1843 = vmatprep.subr.mxu0 0.0
    %1844 = vmatpush2.xpose.msra.mxu0 0.0
    %1845 = vmatprep.subr.mxu0 0.0
    %1846 = vmatpush2.xpose.msra.mxu0 0.0
    %1847 = vmatprep.subr.mxu0 0.0
    %1848 = vmatpush2.xpose.msra.mxu0 0.0
    %1849 = vmatprep.subr.mxu0 0.0
    %1850 = vmatpush2.xpose.msra.mxu0 0.0
    %1851 = vmatprep.subr.mxu0 0.0
    %1852 = vmatpush2.xpose.msra.mxu0 0.0
    %1853 = vmatprep.subr.mxu0 0.0
    %1854 = vmatpush2.xpose.msra.mxu0 0.0
    %1855 = vmatprep.subr.mxu0 0.0
    %1856 = vmatpush2.xpose.msra.mxu0 0.0
    %1857 = vmatprep.subr.mxu0 0.0
    %1858 = vmatpush2.xpose.msra.mxu0 0.0
    %1859 = vmatprep.subr.mxu0 0.0
    %1860 = vmatpush2.xpose.msra.mxu0 0.0
    %1861 = vmatprep.subr.mxu0 0.0
    %1862 = vmatpush2.xpose.msra.mxu0 0.0
    %1863 = vmatprep.subr.mxu0 0.0
    %1864 = vmatpush2.xpose.msra.mxu0 0.0
    %1865 = vmatprep.subr.mxu0 0.0
    %1866 = vmatpush2.xpose.msra.mxu0 0.0
    %1867 = vmatprep.mubr.f32.mxu0 0.0
    %1868 = vmatmul.mubr.f32.gmra.mxu0 %v1801
    %v1869 = vpop.f32.mrf.mxu0
    %v1870 = vadd.f32 %v1797, %v1869
    %v1871 = vpop.f32.mrf.mxu0
    %1872 = vdwg.mxu0
    %1873 = vrot.lane.b32.xlu0 %v709, 112
    %v1874 = vpop.permute.xlu0 %1873
    %1875 = vrot.lane.b32.xlu0 %v1534, 112
    %v1876 = vpop.permute.xlu0 %1875
    %1877 = vrot.lane.b32.xlu0 %v758, 88
    %v1878 = vpop.permute.xlu0 %1877
    %v1879 = vsel %vm515, %v1874, 0
    %v1881 = vsel %vm515, %v1876, 0
    %v1883 = vsel %vm515, %v1878, 0
    %1885 = vmatprep.subr.mxu0 0.0
    %1886 = vmatpush1.xpose.msra.mxu0 0.0
    %1887 = vmatprep.subr.mxu0 0.0
    %1888 = vmatpush1.xpose.msra.mxu0 0.0
    %1889 = vmatprep.subr.mxu0 0.0
    %1890 = vmatpush1.xpose.msra.mxu0 0.0
    %1891 = vmatprep.subr.mxu0 0.0
    %1892 = vmatpush1.xpose.msra.mxu0 0.0
    %1893 = vmatprep.subr.mxu0 0.0
    %1894 = vmatpush1.xpose.msra.mxu0 0.0
    %1895 = vmatprep.subr.mxu0 0.0
    %1896 = vmatpush1.xpose.msra.mxu0 0.0
    %1897 = vmatprep.subr.mxu0 0.0
    %1898 = vmatpush1.xpose.msra.mxu0 0.0
    %1899 = vmatprep.subr.mxu0 0.0
    %1900 = vmatpush1.xpose.msra.mxu0 0.0
    %1901 = vmatprep.subr.mxu0 0.0
    %1902 = vmatpush1.xpose.msra.mxu0 0.0
    %1903 = vmatprep.subr.mxu0 0.0
    %1904 = vmatpush1.xpose.msra.mxu0 0.0
    %1905 = vmatprep.subr.mxu0 0.0
    %1906 = vmatpush1.xpose.msra.mxu0 0.0
    %1907 = vmatprep.subr.mxu0 0.0
    %1908 = vmatpush1.xpose.msra.mxu0 0.0
    %1909 = vmatprep.subr.mxu0 0.0
    %1910 = vmatpush1.xpose.msra.mxu0 0.0
    %1911 = vmatprep.subr.mxu0 0.0
    %1912 = vmatpush1.xpose.msra.mxu0 0.0
    %1913 = vmatprep.subr.mxu0 0.0
    %1914 = vmatpush1.xpose.msra.mxu0 0.0
    %1915 = vmatprep.subr.mxu0 0.0
    %1916 = vmatpush1.xpose.msra.mxu0 %v1883
    %1917 = vmatprep.subr.mxu0 0.0
    %1918 = vmatpush2.xpose.msra.mxu0 0.0
    %1919 = vmatprep.subr.mxu0 0.0
    %1920 = vmatpush2.xpose.msra.mxu0 0.0
    %1921 = vmatprep.subr.mxu0 0.0
    %1922 = vmatpush2.xpose.msra.mxu0 0.0
    %1923 = vmatprep.subr.mxu0 0.0
    %1924 = vmatpush2.xpose.msra.mxu0 0.0
    %1925 = vmatprep.subr.mxu0 0.0
    %1926 = vmatpush2.xpose.msra.mxu0 0.0
    %1927 = vmatprep.subr.mxu0 0.0
    %1928 = vmatpush2.xpose.msra.mxu0 0.0
    %1929 = vmatprep.subr.mxu0 0.0
    %1930 = vmatpush2.xpose.msra.mxu0 0.0
    %1931 = vmatprep.subr.mxu0 0.0
    %1932 = vmatpush2.xpose.msra.mxu0 0.0
    %1933 = vmatprep.subr.mxu0 0.0
    %1934 = vmatpush2.xpose.msra.mxu0 0.0
    %1935 = vmatprep.subr.mxu0 0.0
    %1936 = vmatpush2.xpose.msra.mxu0 0.0
    %1937 = vmatprep.subr.mxu0 0.0
    %1938 = vmatpush2.xpose.msra.mxu0 0.0
    %1939 = vmatprep.subr.mxu0 0.0
    %1940 = vmatpush2.xpose.msra.mxu0 0.0
    %1941 = vmatprep.subr.mxu0 0.0
    %1942 = vmatpush2.xpose.msra.mxu0 0.0
    %1943 = vmatprep.subr.mxu0 0.0
    %1944 = vmatpush2.xpose.msra.mxu0 0.0
    %1945 = vmatprep.subr.mxu0 0.0
    %1946 = vmatpush2.xpose.msra.mxu0 0.0
    %1947 = vmatprep.subr.mxu0 0.0
    %1948 = vmatpush2.xpose.msra.mxu0 0.0
    %1949 = vmatprep.mubr.f32.mxu0 0.0
    %1950 = vmatmul.mubr.f32.gmra.mxu0 %v1879
    %v1951 = vpop.f32.mrf.mxu0
    %v1952 = vadd.f32 0.0, %v1951
    %v1953 = vpop.f32.mrf.mxu0
    %1954 = vmatprep.mubr.f32.mxu0 0.0
    %1955 = vmatmul.mubr.f32.gmra.mxu0 %v1881
    %v1956 = vpop.f32.mrf.mxu0
    %v1957 = vadd.f32 0.0, %v1956
    %v1958 = vpop.f32.mrf.mxu0
    %1959 = vdwg.mxu0
    %v1960 = vsel %vm786, %v1952, -1e+30
    %v1961 = vsel %vm787, %v1957, -1e+30
    %v1962 = vsel %vm515, %v1960, -inf
    %1963 = vmax.xlane.f32.xlu0 %v1962
    %v1964 = vpop.xlane.xlu0 %1963
    %v1965 = vsel %vm515, %v1961, -inf
    %1966 = vmax.xlane.f32.xlu0 %v1965
    %v1967 = vpop.xlane.xlu0 %1966
    %v1968 = vsub.f32 %v1960, %v1964
    %v1969 = vsub.f32 %v1961, %v1967
    %v1970 = vmul.f32 %v1968, 1.442695
    %v1971 = vpow.pop %v1970
    %v1972 = vmul.f32 %v1969, 1.442695
    %v1973 = vpow.pop %v1972
    %v1974 = vsel %vm515, %v1971, 0.0
    %1975 = vadd.xlane.f32.xlu0 %v1974
    %v1976 = vpop.xlane.xlu0 %1975
    %v1977 = vsel %vm515, %v1973, 0.0
    %1978 = vadd.xlane.f32.xlu0 %v1977
    %v1979 = vpop.xlane.xlu0 %1978
    %v1980 = vrcp.pop %v1976
    %v1981 = vmul.f32 %v1971, %v1980
    %v1982 = vrcp.pop %v1979
    %v1983 = vmul.f32 %v1973, %v1982
    %1984 = vrot.lane.b32.xlu0 %v653, 72
    %v1985 = vpop.permute.xlu0 %1984
    %v1988 = vsel %vm515, %v1981, 0
    %v1991 = vsel %vm515, %v1983, 0
    %1993 = vmatprep.subr.mxu0 0.0
    %1994 = vmatpush1.msra.mxu0 0.0
    %1995 = vmatprep.subr.mxu0 0.0
    %1996 = vmatpush1.msra.mxu0 0.0
    %1997 = vmatprep.subr.mxu0 0.0
    %1998 = vmatpush1.msra.mxu0 0.0
    %1999 = vmatprep.subr.mxu0 0.0
    %2000 = vmatpush1.msra.mxu0 0.0
    %2001 = vmatprep.subr.mxu0 0.0
    %2002 = vmatpush1.msra.mxu0 0.0
    %2003 = vmatprep.subr.mxu0 0.0
    %2004 = vmatpush1.msra.mxu0 0.0
    %2005 = vmatprep.subr.mxu0 0.0
    %2006 = vmatpush1.msra.mxu0 0.0
    %2007 = vmatprep.subr.mxu0 0.0
    %2008 = vmatpush1.msra.mxu0 0.0
    %2009 = vmatprep.subr.mxu0 0.0
    %2010 = vmatpush1.msra.mxu0 0.0
    %2011 = vmatprep.subr.mxu0 0.0
    %2012 = vmatpush1.msra.mxu0 0.0
    %2013 = vmatprep.subr.mxu0 0.0
    %2014 = vmatpush1.msra.mxu0 0.0
    %2015 = vmatprep.subr.mxu0 0.0
    %2016 = vmatpush1.msra.mxu0 0.0
    %2017 = vmatprep.subr.mxu0 0.0
    %2018 = vmatpush1.msra.mxu0 0.0
    %2019 = vmatprep.subr.mxu0 0.0
    %2020 = vmatpush1.msra.mxu0 0.0
    %2021 = vmatprep.subr.mxu0 0.0
    %2022 = vmatpush1.msra.mxu0 0.0
    %2023 = vmatprep.subr.mxu0 0.0
    %2024 = vmatpush1.msra.mxu0 %v1985
    %2025 = vmatprep.subr.mxu0 0.0
    %2026 = vmatpush2.msra.mxu0 0.0
    %2027 = vmatprep.subr.mxu0 0.0
    %2028 = vmatpush2.msra.mxu0 0.0
    %2029 = vmatprep.subr.mxu0 0.0
    %2030 = vmatpush2.msra.mxu0 0.0
    %2031 = vmatprep.subr.mxu0 0.0
    %2032 = vmatpush2.msra.mxu0 0.0
    %2033 = vmatprep.subr.mxu0 0.0
    %2034 = vmatpush2.msra.mxu0 0.0
    %2035 = vmatprep.subr.mxu0 0.0
    %2036 = vmatpush2.msra.mxu0 0.0
    %2037 = vmatprep.subr.mxu0 0.0
    %2038 = vmatpush2.msra.mxu0 0.0
    %2039 = vmatprep.subr.mxu0 0.0
    %2040 = vmatpush2.msra.mxu0 0.0
    %2041 = vmatprep.subr.mxu0 0.0
    %2042 = vmatpush2.msra.mxu0 0.0
    %2043 = vmatprep.subr.mxu0 0.0
    %2044 = vmatpush2.msra.mxu0 0.0
    %2045 = vmatprep.subr.mxu0 0.0
    %2046 = vmatpush2.msra.mxu0 0.0
    %2047 = vmatprep.subr.mxu0 0.0
    %2048 = vmatpush2.msra.mxu0 0.0
    %2049 = vmatprep.subr.mxu0 0.0
    %2050 = vmatpush2.msra.mxu0 0.0
    %2051 = vmatprep.subr.mxu0 0.0
    %2052 = vmatpush2.msra.mxu0 0.0
    %2053 = vmatprep.subr.mxu0 0.0
    %2054 = vmatpush2.msra.mxu0 0.0
    %2055 = vmatprep.subr.mxu0 0.0
    %2056 = vmatpush2.msra.mxu0 0.0
    %2057 = vmatprep.mubr.f32.mxu0 0.0
    %2058 = vmatmul.mubr.f32.gmra.mxu0 %v1988
    %v2059 = vpop.f32.mrf.mxu0
    %v2060 = vadd.f32 0.0, %v2059
    %v2061 = vpop.f32.mrf.mxu0
    %2062 = vmatprep.mubr.f32.mxu0 0.0
    %2063 = vmatmul.mubr.f32.gmra.mxu0 %v1991
    %v2064 = vpop.f32.mrf.mxu0
    %v2065 = vadd.f32 0.0, %v2064
    %v2066 = vpop.f32.mrf.mxu0
    %2067 = vdwg.mxu0
    %v2069 = vsel %vm515, %v2060, 0
    %2071 = vmatprep.subr.mxu0 0.0
    %2072 = vmatpush1.xpose.msra.mxu0 0.0
    %2073 = vmatprep.subr.mxu0 0.0
    %2074 = vmatpush1.xpose.msra.mxu0 0.0
    %2075 = vmatprep.subr.mxu0 0.0
    %2076 = vmatpush1.xpose.msra.mxu0 0.0
    %2077 = vmatprep.subr.mxu0 0.0
    %2078 = vmatpush1.xpose.msra.mxu0 0.0
    %2079 = vmatprep.subr.mxu0 0.0
    %2080 = vmatpush1.xpose.msra.mxu0 0.0
    %2081 = vmatprep.subr.mxu0 0.0
    %2082 = vmatpush1.xpose.msra.mxu0 0.0
    %2083 = vmatprep.subr.mxu0 0.0
    %2084 = vmatpush1.xpose.msra.mxu0 0.0
    %2085 = vmatprep.subr.mxu0 0.0
    %2086 = vmatpush1.xpose.msra.mxu0 0.0
    %2087 = vmatprep.subr.mxu0 0.0
    %2088 = vmatpush1.xpose.msra.mxu0 0.0
    %2089 = vmatprep.subr.mxu0 0.0
    %2090 = vmatpush1.xpose.msra.mxu0 0.0
    %2091 = vmatprep.subr.mxu0 0.0
    %2092 = vmatpush1.xpose.msra.mxu0 0.0
    %2093 = vmatprep.subr.mxu0 0.0
    %2094 = vmatpush1.xpose.msra.mxu0 0.0
    %2095 = vmatprep.subr.mxu0 0.0
    %2096 = vmatpush1.xpose.msra.mxu0 %v1369
    %2097 = vmatprep.subr.mxu0 0.0
    %2098 = vmatpush1.xpose.msra.mxu0 %v1367
    %2099 = vmatprep.subr.mxu0 0.0
    %2100 = vmatpush1.xpose.msra.mxu0 %v1365
    %2101 = vmatprep.subr.mxu0 0.0
    %2102 = vmatpush1.xpose.msra.mxu0 %v1363
    %2103 = vmatprep.subr.mxu0 0.0
    %2104 = vmatpush2.xpose.msra.mxu0 0.0
    %2105 = vmatprep.subr.mxu0 0.0
    %2106 = vmatpush2.xpose.msra.mxu0 0.0
    %2107 = vmatprep.subr.mxu0 0.0
    %2108 = vmatpush2.xpose.msra.mxu0 0.0
    %2109 = vmatprep.subr.mxu0 0.0
    %2110 = vmatpush2.xpose.msra.mxu0 0.0
    %2111 = vmatprep.subr.mxu0 0.0
    %2112 = vmatpush2.xpose.msra.mxu0 0.0
    %2113 = vmatprep.subr.mxu0 0.0
    %2114 = vmatpush2.xpose.msra.mxu0 0.0
    %2115 = vmatprep.subr.mxu0 0.0
    %2116 = vmatpush2.xpose.msra.mxu0 0.0
    %2117 = vmatprep.subr.mxu0 0.0
    %2118 = vmatpush2.xpose.msra.mxu0 0.0
    %2119 = vmatprep.subr.mxu0 0.0
    %2120 = vmatpush2.xpose.msra.mxu0 0.0
    %2121 = vmatprep.subr.mxu0 0.0
    %2122 = vmatpush2.xpose.msra.mxu0 0.0
    %2123 = vmatprep.subr.mxu0 0.0
    %2124 = vmatpush2.xpose.msra.mxu0 0.0
    %2125 = vmatprep.subr.mxu0 0.0
    %2126 = vmatpush2.xpose.msra.mxu0 0.0
    %2127 = vmatprep.subr.mxu0 0.0
    %2128 = vmatpush2.xpose.msra.mxu0 0.0
    %2129 = vmatprep.subr.mxu0 0.0
    %2130 = vmatpush2.xpose.msra.mxu0 0.0
    %2131 = vmatprep.subr.mxu0 0.0
    %2132 = vmatpush2.xpose.msra.mxu0 0.0
    %2133 = vmatprep.subr.mxu0 0.0
    %2134 = vmatpush2.xpose.msra.mxu0 0.0
    %2135 = vmatprep.mubr.f32.mxu0 0.0
    %2136 = vmatmul.mubr.f32.gmra.mxu0 %v2069
    %v2137 = vpop.f32.mrf.mxu0
    %v2138 = vadd.f32 0.0, %v2137
    %v2139 = vpop.f32.mrf.mxu0
    %2140 = vdwg.mxu0
    %v2141 = vadd.f32 %v1870, %v2138
    %v2143 = vsel %vm515, %v2065, 0
    %2145 = vmatprep.subr.mxu0 0.0
    %2146 = vmatpush1.xpose.msra.mxu0 0.0
    %2147 = vmatprep.subr.mxu0 0.0
    %2148 = vmatpush1.xpose.msra.mxu0 0.0
    %2149 = vmatprep.subr.mxu0 0.0
    %2150 = vmatpush1.xpose.msra.mxu0 0.0
    %2151 = vmatprep.subr.mxu0 0.0
    %2152 = vmatpush1.xpose.msra.mxu0 0.0
    %2153 = vmatprep.subr.mxu0 0.0
    %2154 = vmatpush1.xpose.msra.mxu0 0.0
    %2155 = vmatprep.subr.mxu0 0.0
    %2156 = vmatpush1.xpose.msra.mxu0 0.0
    %2157 = vmatprep.subr.mxu0 0.0
    %2158 = vmatpush1.xpose.msra.mxu0 0.0
    %2159 = vmatprep.subr.mxu0 0.0
    %2160 = vmatpush1.xpose.msra.mxu0 0.0
    %2161 = vmatprep.subr.mxu0 0.0
    %2162 = vmatpush1.xpose.msra.mxu0 0.0
    %2163 = vmatprep.subr.mxu0 0.0
    %2164 = vmatpush1.xpose.msra.mxu0 0.0
    %2165 = vmatprep.subr.mxu0 0.0
    %2166 = vmatpush1.xpose.msra.mxu0 0.0
    %2167 = vmatprep.subr.mxu0 0.0
    %2168 = vmatpush1.xpose.msra.mxu0 0.0
    %2169 = vmatprep.subr.mxu0 0.0
    %2170 = vmatpush1.xpose.msra.mxu0 %v1459
    %2171 = vmatprep.subr.mxu0 0.0
    %2172 = vmatpush1.xpose.msra.mxu0 %v1457
    %2173 = vmatprep.subr.mxu0 0.0
    %2174 = vmatpush1.xpose.msra.mxu0 %v1455
    %2175 = vmatprep.subr.mxu0 0.0
    %2176 = vmatpush1.xpose.msra.mxu0 %v1453
    %2177 = vmatprep.subr.mxu0 0.0
    %2178 = vmatpush2.xpose.msra.mxu0 0.0
    %2179 = vmatprep.subr.mxu0 0.0
    %2180 = vmatpush2.xpose.msra.mxu0 0.0
    %2181 = vmatprep.subr.mxu0 0.0
    %2182 = vmatpush2.xpose.msra.mxu0 0.0
    %2183 = vmatprep.subr.mxu0 0.0
    %2184 = vmatpush2.xpose.msra.mxu0 0.0
    %2185 = vmatprep.subr.mxu0 0.0
    %2186 = vmatpush2.xpose.msra.mxu0 0.0
    %2187 = vmatprep.subr.mxu0 0.0
    %2188 = vmatpush2.xpose.msra.mxu0 0.0
    %2189 = vmatprep.subr.mxu0 0.0
    %2190 = vmatpush2.xpose.msra.mxu0 0.0
    %2191 = vmatprep.subr.mxu0 0.0
    %2192 = vmatpush2.xpose.msra.mxu0 0.0
    %2193 = vmatprep.subr.mxu0 0.0
    %2194 = vmatpush2.xpose.msra.mxu0 0.0
    %2195 = vmatprep.subr.mxu0 0.0
    %2196 = vmatpush2.xpose.msra.mxu0 0.0
    %2197 = vmatprep.subr.mxu0 0.0
    %2198 = vmatpush2.xpose.msra.mxu0 0.0
    %2199 = vmatprep.subr.mxu0 0.0
    %2200 = vmatpush2.xpose.msra.mxu0 0.0
    %2201 = vmatprep.subr.mxu0 0.0
    %2202 = vmatpush2.xpose.msra.mxu0 0.0
    %2203 = vmatprep.subr.mxu0 0.0
    %2204 = vmatpush2.xpose.msra.mxu0 0.0
    %2205 = vmatprep.subr.mxu0 0.0
    %2206 = vmatpush2.xpose.msra.mxu0 0.0
    %2207 = vmatprep.subr.mxu0 0.0
    %2208 = vmatpush2.xpose.msra.mxu0 0.0
    %2209 = vmatprep.mubr.f32.mxu0 0.0
    %2210 = vmatmul.mubr.f32.gmra.mxu0 %v2143
    %v2211 = vpop.f32.mrf.mxu0
    %v2212 = vadd.f32 0.0, %v2211
    %v2213 = vpop.f32.mrf.mxu0
    %2214 = vdwg.mxu0
    %v2215 = vadd.f32 %v2141, %v2212
    %2218 = vrot.lane.b32.xlu0 %v489, 8
    %v2219 = vpop.permute.xlu0 %2218
    %2220 = vrot.lane.b32.xlu0 %v490, 8
    %v2221 = vpop.permute.xlu0 %2220
    %2226 = vrot.lane.b32.xlu0 %v1531, 16
    %v2227 = vpop.permute.xlu0 %2226
    %2228 = vrot.lane.b32.xlu0 %v2215, 16
    %v2229 = vpop.permute.xlu0 %2228
    %v2232 = vsel %vm515, %v479, %v2219
    %v2233 = vsel %vm515, %v480, %v2221
    %v2234 = vsel %vm518, %v2232, %v2227
    %v2235 = vsel %vm518, %v2233, %v2229
    %vm2236 = vcmask 392192
    %2237 = vst.msk [vmem:[#allocation2] sm:$0xff] %vm2236, %v2234
    %2238 = vst.msk [vmem:[#allocation2 + $0x8] sm:$0xff] %vm2236, %v2235
    // Predicated region
    $region22: #{tpu_custom_call.1} parent=1 // pred_check
      _
    $region23: #{tpu_custom_call.1} parent=1 // pred_check_branch
      %2240 = sbr.rel (0) target = $region25
    $region24: #{tpu_custom_call.1} parent=1 // pred_region
      %s2242 = ssub.s32 256, 256
      %2243 = vsyncadd [#allocation3], %s2242
      %s2244 = sshll.u32 [#allocation2], 4
      %s2245 = int_to_ptr.vmem [resolvable:$true] %s2244
      %2250 = dma.vmem_to_hbm [thread:$0]  %s2245, 256, %s5, [#allocation3], 128, 128, 8
    $region25: #{tpu_custom_call.1} parent=1 // pred_fallthru
      _
    // Predicated region
    $region26: #{tpu_custom_call.1} parent=1 // pred_check
      _
    $region27: #{tpu_custom_call.1} parent=1 // pred_check_branch
      %2252 = sbr.rel (0) target = $region29
    $region28: #{tpu_custom_call.1} parent=1 // pred_region
      %2253 = dma.done [#allocation3], 256
    $region29: #{tpu_custom_call.1} parent=1 // pred_fallthru
      _
    %2254 = vsyncpa [#allocation3], 1

</llo_original>
